<compile_context>
chip_gen: v7x
topology: tpu7x:2x2x1
jax: 0.10.0
libtpu: 0.0.40
codegen_flags: <defaults>
</compile_context>

<pallas_src>
import math
from functools import partial

import numpy as np
import jax
import jax.numpy as jnp
from jax.experimental import pallas as pl
from jax.experimental.pallas import tpu as pltpu

CLIP_DIM = 512
BN_EPS = 1e-5
LANE = 128
SUBLANE = 8
MAX_TILE_ROWS = 256   # batch rows per grid step; VMEM-safe on v7x (64 MiB phys)


def _round_up(x, m):
    return ((x + m - 1) // m) * m


def _tile_rows(batch):
    return min(MAX_TILE_ROWS, max(SUBLANE, _round_up(batch, SUBLANE)))


def _vec_layout(num_hidden, emb_pad):
    """Lane-aligned offsets of the packed per-block small vectors."""
    two_h = 2 * num_hidden
    fields = (("b1", two_h), ("b2", two_h), ("b3", 2 * emb_pad),
              ("bn_a", emb_pad), ("bn_c", emb_pad),
              ("bn_ia", emb_pad), ("bn_ic", emb_pad))
    offs, cur = {}, 0
    for name, width in fields:
        offs[name] = cur
        cur += _round_up(width, LANE)
    return offs, cur


# ----------------------------------------------------------------------------
# Shared math: used both inside the Pallas kernel and as the pure-JAX reference.
# ----------------------------------------------------------------------------
def _flow_compute(x, cond, w1x, w1c_all, w2, w3, vecs, *,
                  inverse, num_blocks, H, E, E_pad, offs):
    """x: (R, E_pad) f32; cond: (R, 512) bf16; weights bf16; vecs f32."""
    TWO_H = 2 * H
    x = x.astype(jnp.float32)

    # Hoisted, x-independent conditioning projection for ALL blocks at once.
    cond_proj = jnp.dot(cond.astype(jnp.bfloat16), w1c_all,
                        preferred_element_type=jnp.float32)   # (R, 2H*NB) f32

    lane = jax.lax.broadcasted_iota(jnp.int32, (1, TWO_H), 1)
    is_scale = lane < H

    def vec(b, name, width):
        off = offs[name]
        return vecs[b, :, off:off + width]                    # (1, width) f32

    def act(h):
        # tanh on scale-net half, relu on translate-net half.
        if H % LANE == 0:
            return jnp.concatenate(
                [jnp.tanh(h[:, :H]), jnp.maximum(h[:, H:], 0.0)], axis=-1)
        return jnp.where(is_scale, jnp.tanh(h), jnp.maximum(h, 0.0))

    def coupling_st(xin, b):
        # Input mask already folded into w1x rows; output mask into w3/b3.
        h = (jnp.dot(xin.astype(jnp.bfloat16), w1x[b],
                     preferred_element_type=jnp.float32)
             + cond_proj[:, b * TWO_H:(b + 1) * TWO_H]
             + vec(b, "b1", TWO_H))
        h = act(h)
        h = jnp.dot(h.astype(jnp.bfloat16), w2[b],
                    preferred_element_type=jnp.float32) + vec(b, "b2", TWO_H)
        h = act(h)
        st = jnp.dot(h.astype(jnp.bfloat16), w3[b],
                     preferred_element_type=jnp.float32) + vec(b, "b3", 2 * E_pad)
        return st[:, :E_pad], st[:, E_pad:]                   # log_s, t (f32)

    if inverse:
        # Sampling direction: BN inverse then coupling inverse, blocks reversed.
        for b in reversed(range(num_blocks)):
            x = x * vec(b, "bn_ia", E_pad) + vec(b, "bn_ic", E_pad)
            log_s, t = coupling_st(x, b)
            x = (x - t) * jnp.exp(-log_s)
        return x

    # Density direction with fused Gaussian log-prob epilogue.
    log_s_sum = jnp.zeros_like(x)
    for b in range(num_blocks):
        log_s, t = coupling_st(x, b)
        x = x * jnp.exp(log_s) + t
        log_s_sum = log_s_sum + log_s
        x = x * vec(b, "bn_a", E_pad) + vec(b, "bn_c", E_pad)
    # padded lanes carry log_s == 0 and x == 0, so a full-lane reduce is exact.
    logp = jnp.sum(log_s_sum - 0.5 * x * x, axis=-1, keepdims=True)
    logp = logp + jnp.float32(-0.5 * E * math.log(2.0 * math.pi))
    return logp                                               # (R, 1) f32


# ----------------------------------------------------------------------------
# Pallas kernel + call wrapper.
# ----------------------------------------------------------------------------
def _make_flow_kernel(*, inverse, num_blocks, H, E, E_pad, offs):
    def kernel(x_ref, cond_ref, w1x_ref, w1c_ref, w2_ref, w3_ref, vecs_ref,
               out_ref):
        res = _flow_compute(
            x_ref[...], cond_ref[...], w1x_ref[...], w1c_ref[...],
            w2_ref[...], w3_ref[...], vecs_ref[...],
            inverse=inverse, num_blocks=num_blocks, H=H, E=E, E_pad=E_pad,
            offs=offs)
        if inverse:
            out_ref[...] = res
        else:
            # lane-dense store of the per-row log-prob (avoid masked vst).
            out_ref[...] = jnp.broadcast_to(res, out_ref.shape)
    return kernel


def _run_flow(params, x, cond, *, inverse, num_blocks, H, E, E_pad, TB, offs):
    """Single pallas_call; batch tiled over a parallel grid, weights resident."""
    B_pad = x.shape[0]
    grid = (B_pad // TB,)
    kernel = _make_flow_kernel(inverse=inverse, num_blocks=num_blocks,
                               H=H, E=E, E_pad=E_pad, offs=offs)

    def rows(width):
        return pl.BlockSpec((TB, width), lambda i: (i, 0))

    def resident(arr):
        return pl.BlockSpec(arr.shape, lambda i, _n=arr.ndim: (0,) * _n)

    in_specs = [rows(E_pad), rows(CLIP_DIM),
                resident(params["w1x"]), resident(params["w1c_all"]),
                resident(params["w2"]), resident(params["w3"]),
                resident(params["vecs"])]
    inputs = (x, cond, params["w1x"], params["w1c_all"],
              params["w2"], params["w3"], params["vecs"])
    cp = pltpu.CompilerParams(dimension_semantics=("parallel",))

    out_width = E_pad if inverse else LANE
    return pl.pallas_call(
        kernel,
        out_shape=jax.ShapeDtypeStruct((B_pad, out_width), jnp.float32),
        grid=grid,
        in_specs=in_specs,
        out_specs=rows(out_width),
        compiler_params=cp,
    )(*inputs)


# ----------------------------------------------------------------------------
# Jitted forward-pass entry points.
# ----------------------------------------------------------------------------
@partial(jax.jit, static_argnames=("num_blocks", "num_hidden", "emb_dim",
                                   "emb_pad"))
def flow_log_prob(params, shape_features, text_features, *,
                  num_blocks, num_hidden, emb_dim, emb_pad):
    B = shape_features.shape[0]
    TB = _tile_rows(B)
    B_pad = _round_up(B, TB)
    offs, _ = _vec_layout(num_hidden, emb_pad)
    x = jnp.pad(shape_features.astype(jnp.float32),
                ((0, B_pad - B), (0, emb_pad - emb_dim)))
    cond = jnp.pad(text_features.astype(jnp.float32),
                   ((0, B_pad - B), (0, 0))).astype(jnp.bfloat16)
    logp_rows = _run_flow(params, x, cond, inverse=False,
                          num_blocks=num_blocks, H=num_hidden,
                          E=emb_dim, E_pad=emb_pad, TB=TB, offs=offs)
    # bn_logdet is a per-row constant -> add after the mean (identical result).
    return jnp.mean(logp_rows[:B, 0]) + params["bn_logdet"]


@partial(jax.jit, static_argnames=("num_blocks", "num_hidden", "emb_dim",
                                   "emb_pad"))
def flow_sample(params, noise, text_features, *,
                num_blocks, num_hidden, emb_dim, emb_pad):
    B = noise.shape[0]
    TB = _tile_rows(B)
    B_pad = _round_up(B, TB)
    offs, _ = _vec_layout(num_hidden, emb_pad)
    u = jnp.pad(noise.astype(jnp.float32),
                ((0, B_pad - B), (0, emb_pad - emb_dim)))
    cond = jnp.pad(text_features.astype(jnp.float32),
                   ((0, B_pad - B), (0, 0))).astype(jnp.bfloat16)
    x_pad = _run_flow(params, u, cond, inverse=True,
                      num_blocks=num_blocks, H=num_hidden,
                      E=emb_dim, E_pad=emb_pad, TB=TB, offs=offs)
    return x_pad[:B, :emb_dim]


# ----------------------------------------------------------------------------
# Parameter init (deterministic, in-script), packed/padded for the kernel.
# Masks are folded into the weights; weights stored in bf16.
# ----------------------------------------------------------------------------
def init_packed_params(key, emb_dim, num_hidden, num_blocks):
    E, C, H = emb_dim, CLIP_DIM, num_hidden
    E_pad = _round_up(E, LANE)
    TWO_H = 2 * H
    offs, VTOT = _vec_layout(H, E_pad)

    w1x_l, w1c_l, w2_l, w3_l, vec_l = [], [], [], [], []
    bn_logdet = jnp.float32(0.0)

    for b in range(num_blocks):
        key, *ks = jax.random.split(key, 9)
        scale = 0.05

        def w(k, shape):
            return (scale * jax.random.normal(k, shape)).astype(jnp.float32)

        # raw coupling weights (scale net: tanh MLP; translate net: relu MLP)
        sW1x, sW1c = w(ks[0], (E, H)), w(ks[1], (C, H))
        sW2, sW3 = w(ks[2], (H, H)), w(ks[3], (H, E))
        tW1x, tW1c = w(ks[4], (E, H)), w(ks[5], (C, H))
        tW2, tW3 = w(ks[6], (H, H)), w(ks[7], (H, E))

        # alternating binary mask, flipped every block
        base = (jnp.arange(E) % 2).astype(jnp.float32)
        m = base if (b % 2 == 0) else 1.0 - base
        om = 1.0 - m

        # --- fold input mask into W1x rows: (x*m) @ W == x @ (diag(m) W) ----
        w1x_p = jnp.zeros((E_pad, TWO_H), jnp.float32)
        w1x_p = w1x_p.at[:E, :H].set(sW1x * m[:, None])
        w1x_p = w1x_p.at[:E, H:].set(tW1x * m[:, None])

        w1c_p = jnp.concatenate([sW1c, tW1c], axis=1)            # (C, 2H)

        w2_p = jnp.zeros((TWO_H, TWO_H), jnp.float32)            # block-diag
        w2_p = w2_p.at[:H, :H].set(sW2).at[H:, H:].set(tW2)

        # --- fold output mask (1-m) into W3 columns (b3 is zero anyway) -----
        w3_p = jnp.zeros((TWO_H, 2 * E_pad), jnp.float32)        # [log_s | t]
        w3_p = w3_p.at[:H, :E].set(sW3 * om[None, :])
        w3_p = w3_p.at[H:, E_pad:E_pad + E].set(tW3 * om[None, :])

        # BatchNormFlow (eval mode, running stats) folded to y = a*x + c
        log_gamma = jnp.zeros((E,), jnp.float32)
        beta = jnp.zeros((E,), jnp.float32)
        rm = jnp.zeros((E,), jnp.float32)
        rv = jnp.ones((E,), jnp.float32)
        var = rv + BN_EPS
        a = jnp.exp(log_gamma) / jnp.sqrt(var)
        c = beta - a * rm
        ia = jnp.sqrt(var) * jnp.exp(-log_gamma)
        ic = rm - ia * beta
        bn_logdet = bn_logdet + jnp.sum(log_gamma - 0.5 * jnp.log(var))

        # packed per-block small vectors [b1|b2|b3|bn_a|bn_c|bn_ia|bn_ic]
        row = jnp.zeros((VTOT,), jnp.float32)          # biases stay zero
        row = row.at[offs["bn_a"]:offs["bn_a"] + E].set(a)
        row = row.at[offs["bn_a"] + E:offs["bn_a"] + E_pad].set(1.0)  # pad=1
        row = row.at[offs["bn_c"]:offs["bn_c"] + E].set(c)
        row = row.at[offs["bn_ia"]:offs["bn_ia"] + E].set(ia)
        row = row.at[offs["bn_ia"] + E:offs["bn_ia"] + E_pad].set(1.0)
        row = row.at[offs["bn_ic"]:offs["bn_ic"] + E].set(ic)

        w1x_l.append(w1x_p); w1c_l.append(w1c_p)
        w2_l.append(w2_p); w3_l.append(w3_p)
        vec_l.append(row[None, :])

    return dict(
        w1x=jnp.stack(w1x_l).astype(jnp.bfloat16),              # (NB,E_pad,2H)
        w1c_all=jnp.concatenate(w1c_l, axis=1).astype(jnp.bfloat16),  # (512,2H*NB)
        w2=jnp.stack(w2_l).astype(jnp.bfloat16),                 # (NB,2H,2H)
        w3=jnp.stack(w3_l).astype(jnp.bfloat16),                 # (NB,2H,2*E_pad)
        vecs=jnp.stack(vec_l),                                   # (NB,1,VTOT) f32
        bn_logdet=jnp.asarray(bn_logdet, jnp.float32),
    )


# ----------------------------------------------------------------------------
# ObjectParamsPredictor (flow model_type) -- forward pass.
# ----------------------------------------------------------------------------
class ObjectParamsPredictorPallas:
    def __init__(self, opts, key):
        self.opts = opts
        if opts["object"] == "tree":
            self.emb_dim = 61 if opts["compress_params"] else 105
            if opts["compress_params"] and opts["map_categorical"]:
                self.emb_dim = 80
        if opts["object"] == "animal":
            self.emb_dim = opts["animal_emb_dim"]
        assert opts["model_type"] == "flow"
        self.num_hidden = opts["num_hidden"]
        self.num_blocks = opts["num_blocks"]
        self.emb_pad = _round_up(self.emb_dim, LANE)
        self.params = init_packed_params(key, self.emb_dim, self.num_hidden,
                                         self.num_blocks)

    def forward(self, text_features, shape_features=None, predict=False,
                sigma=1.0):
        if predict:
            num_samples = text_features.shape[0]
            if self.opts["noise"]:
                # TODO(synk): torch reference draws fresh randn each call;
                # a fixed PRNGKey is used here for determinism.
                noise = sigma * jax.random.normal(
                    jax.random.PRNGKey(1), (num_samples, self.emb_dim),
                    dtype=jnp.float32)
            else:
                noise = jnp.zeros((num_samples, self.emb_dim), jnp.float32)
            return flow_sample(self.params, noise, text_features,
                               num_blocks=self.num_blocks,
                               num_hidden=self.num_hidden,
                               emb_dim=self.emb_dim, emb_pad=self.emb_pad)
        else:
            return flow_log_prob(self.params, shape_features, text_features,
                                 num_blocks=self.num_blocks,
                                 num_hidden=self.num_hidden,
                                 emb_dim=self.emb_dim, emb_pad=self.emb_pad)


# ----------------------------------------------------------------------------
if __name__ == "__main__":
    opts = dict(
        object="animal",
        animal_emb_dim=32,
        compress_params=False,
        map_categorical=False,
        model_type="flow",
        flow_type="realnvp",
        num_blocks=2,
        num_hidden=64,
        noise=False,
        train_mask=False,
        add_mask_cond=False,
        no_compression=True,
    )

    key = jax.random.PRNGKey(0)
    k_param, k_text, k_shape = jax.random.split(key, 3)

    model = ObjectParamsPredictorPallas(opts, k_param)

    batch = 2
    text_features = jax.random.normal(k_text, (batch, CLIP_DIM), jnp.float32)
    shape_features = jax.random.normal(k_shape, (batch, model.emb_dim),
                                       jnp.float32)

    # predict=True path: sample object params from zero noise conditioned on text
    samples = model.forward(text_features, predict=True, sigma=1.0)
    samples = jax.block_until_ready(samples)
    assert samples.shape == (batch, model.emb_dim)
    assert bool(jnp.all(jnp.isfinite(samples)))

    # predict=False path: mean log-prob of shape_features under the flow
    logp = model.forward(text_features, shape_features=shape_features,
                         predict=False)
    logp = jax.block_until_ready(logp)
    assert logp.shape == ()
    assert bool(jnp.isfinite(logp))

    # ---- pure-JAX reference (same math, no Pallas) -------------------------
    TB = _tile_rows(batch)
    B_pad = _round_up(batch, TB)
    offs, _ = _vec_layout(model.num_hidden, model.emb_pad)
    p = model.params
    cond_pad = jnp.pad(text_features,
                       ((0, B_pad - batch), (0, 0))).astype(jnp.bfloat16)

    noise0 = jnp.zeros((batch, model.emb_dim), jnp.float32)
    x0_pad = jnp.pad(noise0, ((0, B_pad - batch),
                              (0, model.emb_pad - model.emb_dim)))
    ref_x = _flow_compute(x0_pad, cond_pad, p["w1x"], p["w1c_all"], p["w2"],
                          p["w3"], p["vecs"], inverse=True,
                          num_blocks=model.num_blocks, H=model.num_hidden,
                          E=model.emb_dim, E_pad=model.emb_pad, offs=offs)
    np.testing.assert_allclose(np.asarray(samples),
                               np.asarray(ref_x[:batch, :model.emb_dim]),
                               rtol=2e-3, atol=2e-3)

    xs_pad = jnp.pad(shape_features, ((0, B_pad - batch),
                                      (0, model.emb_pad - model.emb_dim)))
    ref_rows = _flow_compute(xs_pad, cond_pad, p["w1x"], p["w1c_all"], p["w2"],
                             p["w3"], p["vecs"], inverse=False,
                             num_blocks=model.num_blocks, H=model.num_hidden,
                             E=model.emb_dim, E_pad=model.emb_pad, offs=offs)
    ref_logp = jnp.mean(ref_rows[:batch, 0]) + p["bn_logdet"]
    np.testing.assert_allclose(float(logp), float(ref_logp),
                               rtol=2e-3, atol=2e-3)

    print("KERNEL_OK")
</pallas_src>

<mosaic_0001>
module attributes {stable_mosaic.version = 11 : i64} {
  func.func @kernel(%arg0: i32, %arg1: memref<8x128xf32, #tpu.memory_space<vmem>>, %arg2: memref<8x512xbf16, #tpu.memory_space<vmem>>, %arg3: memref<2x128x128xbf16, #tpu.memory_space<vmem>>, %arg4: memref<512x256xbf16, #tpu.memory_space<vmem>>, %arg5: memref<2x128x128xbf16, #tpu.memory_space<vmem>>, %arg6: memref<2x128x256xbf16, #tpu.memory_space<vmem>>, %arg7: memref<2x1x1024xf32, #tpu.memory_space<vmem>>, %arg8: memref<8x128xf32, #tpu.memory_space<vmem>>) attributes {dimension_semantics = [#tpu.dimension_semantics<parallel>], iteration_bounds = array<i64: 1>, scalar_prefetch = 0 : i64, scratch_operands = 0 : i64, tpu.core_type = #tpu.core_type<tc>, window_params = [{transform_indices = @transform_0, window_bounds = array<i64: 8, 128>}, {transform_indices = @transform_1, window_bounds = array<i64: 8, 512>}, {pipeline_mode = #tpu.pipeline_mode<synchronous>, transform_indices = @transform_2, window_bounds = array<i64: 2, 128, 128>}, {pipeline_mode = #tpu.pipeline_mode<synchronous>, transform_indices = @transform_3, window_bounds = array<i64: 512, 256>}, {pipeline_mode = #tpu.pipeline_mode<synchronous>, transform_indices = @transform_4, window_bounds = array<i64: 2, 128, 128>}, {pipeline_mode = #tpu.pipeline_mode<synchronous>, transform_indices = @transform_5, window_bounds = array<i64: 2, 128, 256>}, {pipeline_mode = #tpu.pipeline_mode<synchronous>, transform_indices = @transform_6, window_bounds = array<i64: 2, 1, 1024>}, {transform_indices = @transform_7, window_bounds = array<i64: 8, 128>}]} {
    %c0 = arith.constant 0 : index
    %c0_0 = arith.constant 0 : index
    %0 = vector.load %arg1[%c0, %c0_0] : memref<8x128xf32, #tpu.memory_space<vmem>>, vector<8x128xf32>
    %c0_1 = arith.constant 0 : index
    %c0_2 = arith.constant 0 : index
    %1 = vector.load %arg2[%c0_1, %c0_2] : memref<8x512xbf16, #tpu.memory_space<vmem>>, vector<8x512xbf16>
    %c0_3 = arith.constant 0 : index
    %c0_4 = arith.constant 0 : index
    %c0_5 = arith.constant 0 : index
    %2 = vector.load %arg3[%c0_3, %c0_4, %c0_5] : memref<2x128x128xbf16, #tpu.memory_space<vmem>>, vector<2x128x128xbf16>
    %c0_6 = arith.constant 0 : index
    %c0_7 = arith.constant 0 : index
    %3 = vector.load %arg4[%c0_6, %c0_7] : memref<512x256xbf16, #tpu.memory_space<vmem>>, vector<512x256xbf16>
    %c0_8 = arith.constant 0 : index
    %c0_9 = arith.constant 0 : index
    %c0_10 = arith.constant 0 : index
    %4 = vector.load %arg5[%c0_8, %c0_9, %c0_10] : memref<2x128x128xbf16, #tpu.memory_space<vmem>>, vector<2x128x128xbf16>
    %c0_11 = arith.constant 0 : index
    %c0_12 = arith.constant 0 : index
    %c0_13 = arith.constant 0 : index
    %5 = vector.load %arg6[%c0_11, %c0_12, %c0_13] : memref<2x128x256xbf16, #tpu.memory_space<vmem>>, vector<2x128x256xbf16>
    %c0_14 = arith.constant 0 : index
    %c0_15 = arith.constant 0 : index
    %c0_16 = arith.constant 0 : index
    %6 = vector.load %arg7[%c0_14, %c0_15, %c0_16] : memref<2x1x1024xf32, #tpu.memory_space<vmem>>, vector<2x1x1024xf32>
    %cst = arith.constant dense<0.000000e+00> : vector<8x256xf32>
    %7 = tpu.matmul %1, %3, %cst {dimension_numbers = #tpu.dot_dimension_numbers<[1], [0], [0], [1], [0, 0, 1, 1], [], []>} : vector<8x512xbf16>, vector<512x256xbf16>, vector<8x256xf32> -> vector<8x256xf32>
    %8 = tpu.iota {dimensions = array<i32: 1>} : vector<1x128xi32>
    %c64_i32 = arith.constant 64 : i32
    %9 = vector.broadcast %c64_i32 : i32 to vector<1x128xi32>
    %10 = arith.cmpi slt, %8, %9 : vector<1x128xi32>
    %11 = vector.extract_strided_slice %6 {offsets = [1, 0, 768], sizes = [1, 1, 128], strides = [1, 1, 1]} : vector<2x1x1024xf32> to vector<1x1x128xf32>
    %12 = vector.shape_cast %11 : vector<1x1x128xf32> to vector<1x128xf32>
    %13 = vector.broadcast %12 : vector<1x128xf32> to vector<8x128xf32>
    %14 = arith.mulf %0, %13 : vector<8x128xf32>
    %15 = vector.extract_strided_slice %6 {offsets = [1, 0, 896], sizes = [1, 1, 128], strides = [1, 1, 1]} : vector<2x1x1024xf32> to vector<1x1x128xf32>
    %16 = vector.shape_cast %15 : vector<1x1x128xf32> to vector<1x128xf32>
    %17 = vector.broadcast %16 : vector<1x128xf32> to vector<8x128xf32>
    %18 = arith.addf %14, %17 : vector<8x128xf32>
    %19 = arith.truncf %18 : vector<8x128xf32> to vector<8x128xbf16>
    %20 = vector.extract_strided_slice %2 {offsets = [1, 0, 0], sizes = [1, 128, 128], strides = [1, 1, 1]} : vector<2x128x128xbf16> to vector<1x128x128xbf16>
    %21 = vector.shape_cast %20 : vector<1x128x128xbf16> to vector<128x128xbf16>
    %cst_17 = arith.constant dense<0.000000e+00> : vector<8x128xf32>
    %22 = tpu.matmul %19, %21, %cst_17 {dimension_numbers = #tpu.dot_dimension_numbers<[1], [0], [0], [1], [0, 0, 1, 1], [], []>} : vector<8x128xbf16>, vector<128x128xbf16>, vector<8x128xf32> -> vector<8x128xf32>
    %23 = vector.extract_strided_slice %7 {offsets = [0, 128], sizes = [8, 128], strides = [1, 1]} : vector<8x256xf32> to vector<8x128xf32>
    %24 = arith.addf %22, %23 : vector<8x128xf32>
    %25 = vector.extract_strided_slice %6 {offsets = [1, 0, 0], sizes = [1, 1, 128], strides = [1, 1, 1]} : vector<2x1x1024xf32> to vector<1x1x128xf32>
    %26 = vector.shape_cast %25 : vector<1x1x128xf32> to vector<1x128xf32>
    %27 = vector.broadcast %26 : vector<1x128xf32> to vector<8x128xf32>
    %28 = arith.addf %24, %27 : vector<8x128xf32>
    %29 = math.tanh %28 : vector<8x128xf32>
    %cst_18 = arith.constant 0.000000e+00 : f32
    %30 = vector.broadcast %cst_18 : f32 to vector<8x128xf32>
    %31 = arith.maximumf %28, %30 : vector<8x128xf32>
    %32 = vector.shape_cast %10 : vector<1x128xi1> to vector<1x128xi1>
    %33 = vector.broadcast %32 : vector<1x128xi1> to vector<8x128xi1>
    %34 = arith.select %33, %29, %31 : vector<8x128xi1>, vector<8x128xf32>
    %35 = arith.truncf %34 : vector<8x128xf32> to vector<8x128xbf16>
    %36 = vector.extract_strided_slice %4 {offsets = [1, 0, 0], sizes = [1, 128, 128], strides = [1, 1, 1]} : vector<2x128x128xbf16> to vector<1x128x128xbf16>
    %37 = vector.shape_cast %36 : vector<1x128x128xbf16> to vector<128x128xbf16>
    %cst_19 = arith.constant dense<0.000000e+00> : vector<8x128xf32>
    %38 = tpu.matmul %35, %37, %cst_19 {dimension_numbers = #tpu.dot_dimension_numbers<[1], [0], [0], [1], [0, 0, 1, 1], [], []>} : vector<8x128xbf16>, vector<128x128xbf16>, vector<8x128xf32> -> vector<8x128xf32>
    %39 = vector.extract_strided_slice %6 {offsets = [1, 0, 128], sizes = [1, 1, 128], strides = [1, 1, 1]} : vector<2x1x1024xf32> to vector<1x1x128xf32>
    %40 = vector.shape_cast %39 : vector<1x1x128xf32> to vector<1x128xf32>
    %41 = vector.broadcast %40 : vector<1x128xf32> to vector<8x128xf32>
    %42 = arith.addf %38, %41 : vector<8x128xf32>
    %43 = math.tanh %42 : vector<8x128xf32>
    %cst_20 = arith.constant 0.000000e+00 : f32
    %44 = vector.broadcast %cst_20 : f32 to vector<8x128xf32>
    %45 = arith.maximumf %42, %44 : vector<8x128xf32>
    %46 = vector.shape_cast %10 : vector<1x128xi1> to vector<1x128xi1>
    %47 = vector.broadcast %46 : vector<1x128xi1> to vector<8x128xi1>
    %48 = arith.select %47, %43, %45 : vector<8x128xi1>, vector<8x128xf32>
    %49 = arith.truncf %48 : vector<8x128xf32> to vector<8x128xbf16>
    %50 = vector.extract_strided_slice %5 {offsets = [1, 0, 0], sizes = [1, 128, 256], strides = [1, 1, 1]} : vector<2x128x256xbf16> to vector<1x128x256xbf16>
    %51 = vector.shape_cast %50 : vector<1x128x256xbf16> to vector<128x256xbf16>
    %cst_21 = arith.constant dense<0.000000e+00> : vector<8x256xf32>
    %52 = tpu.matmul %49, %51, %cst_21 {dimension_numbers = #tpu.dot_dimension_numbers<[1], [0], [0], [1], [0, 0, 1, 1], [], []>} : vector<8x128xbf16>, vector<128x256xbf16>, vector<8x256xf32> -> vector<8x256xf32>
    %53 = vector.extract_strided_slice %6 {offsets = [1, 0, 256], sizes = [1, 1, 256], strides = [1, 1, 1]} : vector<2x1x1024xf32> to vector<1x1x256xf32>
    %54 = vector.shape_cast %53 : vector<1x1x256xf32> to vector<1x256xf32>
    %55 = vector.broadcast %54 : vector<1x256xf32> to vector<8x256xf32>
    %56 = arith.addf %52, %55 : vector<8x256xf32>
    %57 = vector.extract_strided_slice %56 {offsets = [0, 0], sizes = [8, 128], strides = [1, 1]} : vector<8x256xf32> to vector<8x128xf32>
    %58 = vector.extract_strided_slice %56 {offsets = [0, 128], sizes = [8, 128], strides = [1, 1]} : vector<8x256xf32> to vector<8x128xf32>
    %59 = arith.subf %18, %58 : vector<8x128xf32>
    %cst_22 = arith.constant 0.000000e+00 : f32
    %60 = vector.broadcast %cst_22 : f32 to vector<8x128xf32>
    %61 = arith.subf %60, %57 : vector<8x128xf32>
    %62 = math.exp %61 : vector<8x128xf32>
    %63 = arith.mulf %59, %62 : vector<8x128xf32>
    %64 = vector.extract_strided_slice %6 {offsets = [0, 0, 768], sizes = [1, 1, 128], strides = [1, 1, 1]} : vector<2x1x1024xf32> to vector<1x1x128xf32>
    %65 = vector.shape_cast %64 : vector<1x1x128xf32> to vector<1x128xf32>
    %66 = vector.broadcast %65 : vector<1x128xf32> to vector<8x128xf32>
    %67 = arith.mulf %63, %66 : vector<8x128xf32>
    %68 = vector.extract_strided_slice %6 {offsets = [0, 0, 896], sizes = [1, 1, 128], strides = [1, 1, 1]} : vector<2x1x1024xf32> to vector<1x1x128xf32>
    %69 = vector.shape_cast %68 : vector<1x1x128xf32> to vector<1x128xf32>
    %70 = vector.broadcast %69 : vector<1x128xf32> to vector<8x128xf32>
    %71 = arith.addf %67, %70 : vector<8x128xf32>
    %72 = arith.truncf %71 : vector<8x128xf32> to vector<8x128xbf16>
    %73 = vector.extract_strided_slice %2 {offsets = [0, 0, 0], sizes = [1, 128, 128], strides = [1, 1, 1]} : vector<2x128x128xbf16> to vector<1x128x128xbf16>
    %74 = vector.shape_cast %73 : vector<1x128x128xbf16> to vector<128x128xbf16>
    %cst_23 = arith.constant dense<0.000000e+00> : vector<8x128xf32>
    %75 = tpu.matmul %72, %74, %cst_23 {dimension_numbers = #tpu.dot_dimension_numbers<[1], [0], [0], [1], [0, 0, 1, 1], [], []>} : vector<8x128xbf16>, vector<128x128xbf16>, vector<8x128xf32> -> vector<8x128xf32>
    %76 = vector.extract_strided_slice %7 {offsets = [0, 0], sizes = [8, 128], strides = [1, 1]} : vector<8x256xf32> to vector<8x128xf32>
    %77 = arith.addf %75, %76 : vector<8x128xf32>
    %78 = vector.extract_strided_slice %6 {offsets = [0, 0, 0], sizes = [1, 1, 128], strides = [1, 1, 1]} : vector<2x1x1024xf32> to vector<1x1x128xf32>
    %79 = vector.shape_cast %78 : vector<1x1x128xf32> to vector<1x128xf32>
    %80 = vector.broadcast %79 : vector<1x128xf32> to vector<8x128xf32>
    %81 = arith.addf %77, %80 : vector<8x128xf32>
    %82 = math.tanh %81 : vector<8x128xf32>
    %cst_24 = arith.constant 0.000000e+00 : f32
    %83 = vector.broadcast %cst_24 : f32 to vector<8x128xf32>
    %84 = arith.maximumf %81, %83 : vector<8x128xf32>
    %85 = vector.shape_cast %10 : vector<1x128xi1> to vector<1x128xi1>
    %86 = vector.broadcast %85 : vector<1x128xi1> to vector<8x128xi1>
    %87 = arith.select %86, %82, %84 : vector<8x128xi1>, vector<8x128xf32>
    %88 = arith.truncf %87 : vector<8x128xf32> to vector<8x128xbf16>
    %89 = vector.extract_strided_slice %4 {offsets = [0, 0, 0], sizes = [1, 128, 128], strides = [1, 1, 1]} : vector<2x128x128xbf16> to vector<1x128x128xbf16>
    %90 = vector.shape_cast %89 : vector<1x128x128xbf16> to vector<128x128xbf16>
    %cst_25 = arith.constant dense<0.000000e+00> : vector<8x128xf32>
    %91 = tpu.matmul %88, %90, %cst_25 {dimension_numbers = #tpu.dot_dimension_numbers<[1], [0], [0], [1], [0, 0, 1, 1], [], []>} : vector<8x128xbf16>, vector<128x128xbf16>, vector<8x128xf32> -> vector<8x128xf32>
    %92 = vector.extract_strided_slice %6 {offsets = [0, 0, 128], sizes = [1, 1, 128], strides = [1, 1, 1]} : vector<2x1x1024xf32> to vector<1x1x128xf32>
    %93 = vector.shape_cast %92 : vector<1x1x128xf32> to vector<1x128xf32>
    %94 = vector.broadcast %93 : vector<1x128xf32> to vector<8x128xf32>
    %95 = arith.addf %91, %94 : vector<8x128xf32>
    %96 = math.tanh %95 : vector<8x128xf32>
    %cst_26 = arith.constant 0.000000e+00 : f32
    %97 = vector.broadcast %cst_26 : f32 to vector<8x128xf32>
    %98 = arith.maximumf %95, %97 : vector<8x128xf32>
    %99 = vector.shape_cast %10 : vector<1x128xi1> to vector<1x128xi1>
    %100 = vector.broadcast %99 : vector<1x128xi1> to vector<8x128xi1>
    %101 = arith.select %100, %96, %98 : vector<8x128xi1>, vector<8x128xf32>
    %102 = arith.truncf %101 : vector<8x128xf32> to vector<8x128xbf16>
    %103 = vector.extract_strided_slice %5 {offsets = [0, 0, 0], sizes = [1, 128, 256], strides = [1, 1, 1]} : vector<2x128x256xbf16> to vector<1x128x256xbf16>
    %104 = vector.shape_cast %103 : vector<1x128x256xbf16> to vector<128x256xbf16>
    %cst_27 = arith.constant dense<0.000000e+00> : vector<8x256xf32>
    %105 = tpu.matmul %102, %104, %cst_27 {dimension_numbers = #tpu.dot_dimension_numbers<[1], [0], [0], [1], [0, 0, 1, 1], [], []>} : vector<8x128xbf16>, vector<128x256xbf16>, vector<8x256xf32> -> vector<8x256xf32>
    %106 = vector.extract_strided_slice %6 {offsets = [0, 0, 256], sizes = [1, 1, 256], strides = [1, 1, 1]} : vector<2x1x1024xf32> to vector<1x1x256xf32>
    %107 = vector.shape_cast %106 : vector<1x1x256xf32> to vector<1x256xf32>
    %108 = vector.broadcast %107 : vector<1x256xf32> to vector<8x256xf32>
    %109 = arith.addf %105, %108 : vector<8x256xf32>
    %110 = vector.extract_strided_slice %109 {offsets = [0, 0], sizes = [8, 128], strides = [1, 1]} : vector<8x256xf32> to vector<8x128xf32>
    %111 = vector.extract_strided_slice %109 {offsets = [0, 128], sizes = [8, 128], strides = [1, 1]} : vector<8x256xf32> to vector<8x128xf32>
    %112 = arith.subf %71, %111 : vector<8x128xf32>
    %cst_28 = arith.constant 0.000000e+00 : f32
    %113 = vector.broadcast %cst_28 : f32 to vector<8x128xf32>
    %114 = arith.subf %113, %110 : vector<8x128xf32>
    %115 = math.exp %114 : vector<8x128xf32>
    %116 = arith.mulf %112, %115 : vector<8x128xf32>
    %c0_29 = arith.constant 0 : index
    %c0_30 = arith.constant 0 : index
    %117 = vector.load %arg8[%c0_29, %c0_30] : memref<8x128xf32, #tpu.memory_space<vmem>>, vector<8x128xf32>
    tpu.vector_store %arg8[%c0_29, %c0_30], %116 {strides = array<i32>} : memref<8x128xf32, #tpu.memory_space<vmem>>, vector<8x128xf32>,
    return
  }
  func.func @transform_0(%arg0: i32) -> (i32, i32) {
    %c0_i32 = arith.constant 0 : i32
    %c0_i32_0 = arith.constant 0 : i32
    return %arg0, %c0_i32 : i32, i32
  }
  func.func @transform_1(%arg0: i32) -> (i32, i32) {
    %c0_i32 = arith.constant 0 : i32
    %c0_i32_0 = arith.constant 0 : i32
    return %arg0, %c0_i32 : i32, i32
  }
  func.func @transform_2(%arg0: i32) -> (i32, i32, i32) {
    %c0_i32 = arith.constant 0 : i32
    %c0_i32_0 = arith.constant 0 : i32
    %c0_i32_1 = arith.constant 0 : i32
    %c0_i32_2 = arith.constant 0 : i32
    return %c0_i32, %c0_i32_0, %c0_i32_1 : i32, i32, i32
  }
  func.func @transform_3(%arg0: i32) -> (i32, i32) {
    %c0_i32 = arith.constant 0 : i32
    %c0_i32_0 = arith.constant 0 : i32
    %c0_i32_1 = arith.constant 0 : i32
    return %c0_i32, %c0_i32_0 : i32, i32
  }
  func.func @transform_4(%arg0: i32) -> (i32, i32, i32) {
    %c0_i32 = arith.constant 0 : i32
    %c0_i32_0 = arith.constant 0 : i32
    %c0_i32_1 = arith.constant 0 : i32
    %c0_i32_2 = arith.constant 0 : i32
    return %c0_i32, %c0_i32_0, %c0_i32_1 : i32, i32, i32
  }
  func.func @transform_5(%arg0: i32) -> (i32, i32, i32) {
    %c0_i32 = arith.constant 0 : i32
    %c0_i32_0 = arith.constant 0 : i32
    %c0_i32_1 = arith.constant 0 : i32
    %c0_i32_2 = arith.constant 0 : i32
    return %c0_i32, %c0_i32_0, %c0_i32_1 : i32, i32, i32
  }
  func.func @transform_6(%arg0: i32) -> (i32, i32, i32) {
    %c0_i32 = arith.constant 0 : i32
    %c0_i32_0 = arith.constant 0 : i32
    %c0_i32_1 = arith.constant 0 : i32
    %c0_i32_2 = arith.constant 0 : i32
    return %c0_i32, %c0_i32_0, %c0_i32_1 : i32, i32, i32
  }
  func.func @transform_7(%arg0: i32) -> (i32, i32) {
    %c0_i32 = arith.constant 0 : i32
    %c0_i32_0 = arith.constant 0 : i32
    return %arg0, %c0_i32 : i32, i32
  }
}

</mosaic_0001>

<llo_original>
// kernel: flow_sample.1
$region0: #{flow_sample.1}
  #allocation0 [shape = 'u32[]', space=smem, size = 0x4, offset = 0x4, fixed_abs, tag = 'smem constant byte address 0x4 - core index']
  #allocation1 [shape = 'u32[144,128]{1,0:T(1,128)}', space=vmem, size = 0x12000, scoped, tag = 'internal scratch']
  %s0 = inlined_call_operand.vmem [shape: f32[8,128], index: 0, kind: input, shape index: {}]
  %s1 = inlined_call_operand.vmem [shape: bf16[8,512], index: 1, kind: input, shape index: {}]
  %s2 = inlined_call_operand.hbm [shape: bf16[2,128,128], index: 2, kind: input, shape index: {}]
  %s3 = inlined_call_operand.hbm [shape: bf16[512,256], index: 3, kind: input, shape index: {}]
  %s4 = inlined_call_operand.hbm [shape: bf16[2,128,128], index: 4, kind: input, shape index: {}]
  %s5 = inlined_call_operand.hbm [shape: bf16[2,128,256], index: 5, kind: input, shape index: {}]
  %s6 = inlined_call_operand.vmem [shape: f32[2,1,1024], index: 6, kind: input, shape index: {}]
  %s7 = inlined_call_operand.vmem [shape: f32[8,128], index: 7, kind: output, shape index: {}]
  %s8 = sld [smem:[#allocation0]]
  $region54: #{flow_sample.1} parent=0
    _
  %s10 = ssub.s32 1, %s8
  %s11 = scalar_select 0, %s10, %s8
  $region1: #{flow_sample.1} parent=0
    #allocation2 [shape = 'u8[65536]{0}', space=vmem, size = 0x10000, scoped, tag = 'input window, operand 2, single buffered']
    #allocation3 [shape = 's32[1]{0}', space=sflag, size = 0x4, scoped, tag = 'scoped memory for flow_sample.1']
    #allocation4 [shape = 'u8[262144]{0}', space=vmem, size = 0x40000, scoped, tag = 'input window, operand 3, single buffered']
    #allocation5 [shape = 's32[1]{0}', space=sflag, size = 0x4, scoped, tag = 'scoped memory for flow_sample.1']
    #allocation6 [shape = 'u8[65536]{0}', space=vmem, size = 0x10000, scoped, tag = 'input window, operand 4, single buffered']
    #allocation7 [shape = 'u8[131072]{0}', space=vmem, size = 0x20000, scoped, tag = 'input window, operand 5, single buffered']
    #allocation8 [shape = 's32[1]{0}', space=sflag, size = 0x4, scoped, tag = 'scoped memory for flow_sample.1']
    %12 = vsyncpa [#allocation3], 0
    %13 = vsyncpa [#allocation5], 0
    %14 = vsyncpa [#allocation8], 0
    // Predicated region
    $region2: #{flow_sample.1} parent=1 // pred_check
      _
    $region3: #{flow_sample.1} parent=1 // pred_check_branch
      %16 = sbr.rel (0) target = $region5
    $region4: #{flow_sample.1} parent=1 // pred_region
      _
    $region5: #{flow_sample.1} parent=1 // pred_fallthru
      _
    // Predicated region
    $region6: #{flow_sample.1} parent=1 // pred_check
      _
    $region7: #{flow_sample.1} parent=1 // pred_check_branch
      %18 = sbr.rel (0) target = $region9
    $region8: #{flow_sample.1} parent=1 // pred_region
      _
    $region9: #{flow_sample.1} parent=1 // pred_fallthru
      _
    // Predicated region
    $region10: #{flow_sample.1} parent=1 // pred_check
      _
    $region11: #{flow_sample.1} parent=1 // pred_check_branch
      %20 = sbr.rel (0) target = $region13
    $region12: #{flow_sample.1} parent=1 // pred_region
      %s22 = ssub.s32 2048, 2048
      %23 = vsyncadd [#allocation3], %s22
      %s24 = sshll.u32 [#allocation2], 4
      %s25 = int_to_ptr.vmem [resolvable:$true] %s24
      %30 = dma.hbm_to_vmem [thread:$0]  %s2, 2048, %s25, [#allocation3], 64, 64, 4
    $region13: #{flow_sample.1} parent=1 // pred_fallthru
      _
    // Predicated region
    $region14: #{flow_sample.1} parent=1 // pred_check
      _
    $region15: #{flow_sample.1} parent=1 // pred_check_branch
      %32 = sbr.rel (0) target = $region17
    $region16: #{flow_sample.1} parent=1 // pred_region
      %s34 = ssub.s32 8192, 8192
      %35 = vsyncadd [#allocation5], %s34
      %s36 = sshll.u32 [#allocation4], 4
      %s37 = int_to_ptr.vmem [resolvable:$true] %s36
      %42 = dma.hbm_to_vmem [thread:$0]  %s3, 8192, %s37, [#allocation5], 128, 128, 8
    $region17: #{flow_sample.1} parent=1 // pred_fallthru
      _
    // Predicated region
    $region18: #{flow_sample.1} parent=1 // pred_check
      _
    $region19: #{flow_sample.1} parent=1 // pred_check_branch
      %44 = sbr.rel (0) target = $region21
    $region20: #{flow_sample.1} parent=1 // pred_region
      %s46 = ssub.s32 2048, 2048
      %47 = vsyncadd [#allocation5], %s46
      %s48 = sshll.u32 [#allocation6], 4
      %s49 = int_to_ptr.vmem [resolvable:$true] %s48
      %54 = dma.hbm_to_vmem [thread:$0]  %s4, 2048, %s49, [#allocation5], 64, 64, 4
    $region21: #{flow_sample.1} parent=1 // pred_fallthru
      _
    // Predicated region
    $region22: #{flow_sample.1} parent=1 // pred_check
      _
    $region23: #{flow_sample.1} parent=1 // pred_check_branch
      %56 = sbr.rel (0) target = $region25
    $region24: #{flow_sample.1} parent=1 // pred_region
      %s58 = ssub.s32 4096, 4096
      %59 = vsyncadd [#allocation8], %s58
      %s60 = sshll.u32 [#allocation7], 4
      %s61 = int_to_ptr.vmem [resolvable:$true] %s60
      %66 = dma.hbm_to_vmem [thread:$0]  %s5, 4096, %s61, [#allocation8], 128, 128, 8
    $region25: #{flow_sample.1} parent=1 // pred_fallthru
      _
    // Predicated region
    $region26: #{flow_sample.1} parent=1 // pred_check
      _
    $region27: #{flow_sample.1} parent=1 // pred_check_branch
      %68 = sbr.rel (0) target = $region29
    $region28: #{flow_sample.1} parent=1 // pred_region
      _
    $region29: #{flow_sample.1} parent=1 // pred_fallthru
      _
    // Predicated region
    $region30: #{flow_sample.1} parent=1 // pred_check
      _
    $region31: #{flow_sample.1} parent=1 // pred_check_branch
      %70 = sbr.rel (0) target = $region33
    $region32: #{flow_sample.1} parent=1 // pred_region
      %71 = dma.done [#allocation3], 2048
    $region33: #{flow_sample.1} parent=1 // pred_fallthru
      _
    // Predicated region
    $region34: #{flow_sample.1} parent=1 // pred_check
      _
    $region35: #{flow_sample.1} parent=1 // pred_check_branch
      %73 = sbr.rel (0) target = $region37
    $region36: #{flow_sample.1} parent=1 // pred_region
      %74 = dma.done [#allocation5], 8192
    $region37: #{flow_sample.1} parent=1 // pred_fallthru
      _
    // Predicated region
    $region38: #{flow_sample.1} parent=1 // pred_check
      _
    $region39: #{flow_sample.1} parent=1 // pred_check_branch
      %76 = sbr.rel (0) target = $region41
    $region40: #{flow_sample.1} parent=1 // pred_region
      %77 = dma.done [#allocation5], 2048
    $region41: #{flow_sample.1} parent=1 // pred_fallthru
      _
    // Predicated region
    $region42: #{flow_sample.1} parent=1 // pred_check
      _
    $region43: #{flow_sample.1} parent=1 // pred_check_branch
      %79 = sbr.rel (0) target = $region45
    $region44: #{flow_sample.1} parent=1 // pred_region
      %80 = dma.done [#allocation8], 4096
    $region45: #{flow_sample.1} parent=1 // pred_fallthru
      _
    %v82 = vld [vmem:[%s0] sm:$0xff]
    %v83 = vld [vmem:[%s1] sm:$0xff]
    %v84 = vld [vmem:[%s1 + $0x8] sm:$0xff]
    %v85 = vld [vmem:[#allocation2] sm:$0xf]
    %v86 = vld [vmem:[#allocation2 + $0x4] sm:$0xf]
    %v87 = vld [vmem:[#allocation2 + $0x8] sm:$0xf]
    %v88 = vld [vmem:[#allocation2 + $0xc] sm:$0xf]
    %v89 = vld [vmem:[#allocation2 + $0x10] sm:$0xf]
    %v90 = vld [vmem:[#allocation2 + $0x14] sm:$0xf]
    %v91 = vld [vmem:[#allocation2 + $0x18] sm:$0xf]
    %v92 = vld [vmem:[#allocation2 + $0x1c] sm:$0xf]
    %v93 = vld [vmem:[#allocation2 + $0x20] sm:$0xf]
    %v94 = vld [vmem:[#allocation2 + $0x24] sm:$0xf]
    %v95 = vld [vmem:[#allocation2 + $0x28] sm:$0xf]
    %v96 = vld [vmem:[#allocation2 + $0x2c] sm:$0xf]
    %v97 = vld [vmem:[#allocation2 + $0x30] sm:$0xf]
    %v98 = vld [vmem:[#allocation2 + $0x34] sm:$0xf]
    %v99 = vld [vmem:[#allocation2 + $0x38] sm:$0xf]
    %v100 = vld [vmem:[#allocation2 + $0x3c] sm:$0xf]
    %v101 = vld [vmem:[#allocation2 + $0x40] sm:$0xf]
    %v102 = vld [vmem:[#allocation2 + $0x44] sm:$0xf]
    %v103 = vld [vmem:[#allocation2 + $0x48] sm:$0xf]
    %v104 = vld [vmem:[#allocation2 + $0x4c] sm:$0xf]
    %v105 = vld [vmem:[#allocation2 + $0x50] sm:$0xf]
    %v106 = vld [vmem:[#allocation2 + $0x54] sm:$0xf]
    %v107 = vld [vmem:[#allocation2 + $0x58] sm:$0xf]
    %v108 = vld [vmem:[#allocation2 + $0x5c] sm:$0xf]
    %v109 = vld [vmem:[#allocation2 + $0x60] sm:$0xf]
    %v110 = vld [vmem:[#allocation2 + $0x64] sm:$0xf]
    %v111 = vld [vmem:[#allocation2 + $0x68] sm:$0xf]
    %v112 = vld [vmem:[#allocation2 + $0x6c] sm:$0xf]
    %v113 = vld [vmem:[#allocation2 + $0x70] sm:$0xf]
    %v114 = vld [vmem:[#allocation2 + $0x74] sm:$0xf]
    %v115 = vld [vmem:[#allocation2 + $0x78] sm:$0xf]
    %v116 = vld [vmem:[#allocation2 + $0x7c] sm:$0xf]
    %v117 = vld [vmem:[#allocation4] sm:$0xff]
    %v118 = vld [vmem:[#allocation4 + $0x8] sm:$0xff]
    %v119 = vld [vmem:[#allocation4 + $0x10] sm:$0xff]
    %v120 = vld [vmem:[#allocation4 + $0x18] sm:$0xff]
    %v121 = vld [vmem:[#allocation4 + $0x20] sm:$0xff]
    %v122 = vld [vmem:[#allocation4 + $0x28] sm:$0xff]
    %v123 = vld [vmem:[#allocation4 + $0x30] sm:$0xff]
    %v124 = vld [vmem:[#allocation4 + $0x38] sm:$0xff]
    %v125 = vld [vmem:[#allocation4 + $0x40] sm:$0xff]
    %v126 = vld [vmem:[#allocation4 + $0x48] sm:$0xff]
    %v127 = vld [vmem:[#allocation4 + $0x50] sm:$0xff]
    %v128 = vld [vmem:[#allocation4 + $0x58] sm:$0xff]
    %v129 = vld [vmem:[#allocation4 + $0x60] sm:$0xff]
    %v130 = vld [vmem:[#allocation4 + $0x68] sm:$0xff]
    %v131 = vld [vmem:[#allocation4 + $0x70] sm:$0xff]
    %v132 = vld [vmem:[#allocation4 + $0x78] sm:$0xff]
    %v133 = vld [vmem:[#allocation4 + $0x80] sm:$0xff]
    %v134 = vld [vmem:[#allocation4 + $0x88] sm:$0xff]
    %v135 = vld [vmem:[#allocation4 + $0x90] sm:$0xff]
    %v136 = vld [vmem:[#allocation4 + $0x98] sm:$0xff]
    %v137 = vld [vmem:[#allocation4 + $0xa0] sm:$0xff]
    %v138 = vld [vmem:[#allocation4 + $0xa8] sm:$0xff]
    %v139 = vld [vmem:[#allocation4 + $0xb0] sm:$0xff]
    %v140 = vld [vmem:[#allocation4 + $0xb8] sm:$0xff]
    %v141 = vld [vmem:[#allocation4 + $0xc0] sm:$0xff]
    %v142 = vld [vmem:[#allocation4 + $0xc8] sm:$0xff]
    %v143 = vld [vmem:[#allocation4 + $0xd0] sm:$0xff]
    %v144 = vld [vmem:[#allocation4 + $0xd8] sm:$0xff]
    %v145 = vld [vmem:[#allocation4 + $0xe0] sm:$0xff]
    %v146 = vld [vmem:[#allocation4 + $0xe8] sm:$0xff]
    %v147 = vld [vmem:[#allocation4 + $0xf0] sm:$0xff]
    %v148 = vld [vmem:[#allocation4 + $0xf8] sm:$0xff]
    %v149 = vld [vmem:[#allocation4 + $0x100] sm:$0xff]
    %v150 = vld [vmem:[#allocation4 + $0x108] sm:$0xff]
    %v151 = vld [vmem:[#allocation4 + $0x110] sm:$0xff]
    %v152 = vld [vmem:[#allocation4 + $0x118] sm:$0xff]
    %v153 = vld [vmem:[#allocation4 + $0x120] sm:$0xff]
    %v154 = vld [vmem:[#allocation4 + $0x128] sm:$0xff]
    %v155 = vld [vmem:[#allocation4 + $0x130] sm:$0xff]
    %v156 = vld [vmem:[#allocation4 + $0x138] sm:$0xff]
    %v157 = vld [vmem:[#allocation4 + $0x140] sm:$0xff]
    %v158 = vld [vmem:[#allocation4 + $0x148] sm:$0xff]
    %v159 = vld [vmem:[#allocation4 + $0x150] sm:$0xff]
    %v160 = vld [vmem:[#allocation4 + $0x158] sm:$0xff]
    %v161 = vld [vmem:[#allocation4 + $0x160] sm:$0xff]
    %v162 = vld [vmem:[#allocation4 + $0x168] sm:$0xff]
    %v163 = vld [vmem:[#allocation4 + $0x170] sm:$0xff]
    %v164 = vld [vmem:[#allocation4 + $0x178] sm:$0xff]
    %v165 = vld [vmem:[#allocation4 + $0x180] sm:$0xff]
    %v166 = vld [vmem:[#allocation4 + $0x188] sm:$0xff]
    %v167 = vld [vmem:[#allocation4 + $0x190] sm:$0xff]
    %v168 = vld [vmem:[#allocation4 + $0x198] sm:$0xff]
    %v169 = vld [vmem:[#allocation4 + $0x1a0] sm:$0xff]
    %v170 = vld [vmem:[#allocation4 + $0x1a8] sm:$0xff]
    %v171 = vld [vmem:[#allocation4 + $0x1b0] sm:$0xff]
    %v172 = vld [vmem:[#allocation4 + $0x1b8] sm:$0xff]
    %v173 = vld [vmem:[#allocation4 + $0x1c0] sm:$0xff]
    %v174 = vld [vmem:[#allocation4 + $0x1c8] sm:$0xff]
    %v175 = vld [vmem:[#allocation4 + $0x1d0] sm:$0xff]
    %v176 = vld [vmem:[#allocation4 + $0x1d8] sm:$0xff]
    %v177 = vld [vmem:[#allocation4 + $0x1e0] sm:$0xff]
    %v178 = vld [vmem:[#allocation4 + $0x1e8] sm:$0xff]
    %v179 = vld [vmem:[#allocation4 + $0x1f0] sm:$0xff]
    %v180 = vld [vmem:[#allocation4 + $0x1f8] sm:$0xff]
    %v181 = vld [vmem:[#allocation6] sm:$0xf]
    %v182 = vld [vmem:[#allocation6 + $0x4] sm:$0xf]
    %v183 = vld [vmem:[#allocation6 + $0x8] sm:$0xf]
    %v184 = vld [vmem:[#allocation6 + $0xc] sm:$0xf]
    %v185 = vld [vmem:[#allocation6 + $0x10] sm:$0xf]
    %v186 = vld [vmem:[#allocation6 + $0x14] sm:$0xf]
    %v187 = vld [vmem:[#allocation6 + $0x18] sm:$0xf]
    %v188 = vld [vmem:[#allocation6 + $0x1c] sm:$0xf]
    %v189 = vld [vmem:[#allocation6 + $0x20] sm:$0xf]
    %v190 = vld [vmem:[#allocation6 + $0x24] sm:$0xf]
    %v191 = vld [vmem:[#allocation6 + $0x28] sm:$0xf]
    %v192 = vld [vmem:[#allocation6 + $0x2c] sm:$0xf]
    %v193 = vld [vmem:[#allocation6 + $0x30] sm:$0xf]
    %v194 = vld [vmem:[#allocation6 + $0x34] sm:$0xf]
    %v195 = vld [vmem:[#allocation6 + $0x38] sm:$0xf]
    %v196 = vld [vmem:[#allocation6 + $0x3c] sm:$0xf]
    %v197 = vld [vmem:[#allocation6 + $0x40] sm:$0xf]
    %v198 = vld [vmem:[#allocation6 + $0x44] sm:$0xf]
    %v199 = vld [vmem:[#allocation6 + $0x48] sm:$0xf]
    %v200 = vld [vmem:[#allocation6 + $0x4c] sm:$0xf]
    %v201 = vld [vmem:[#allocation6 + $0x50] sm:$0xf]
    %v202 = vld [vmem:[#allocation6 + $0x54] sm:$0xf]
    %v203 = vld [vmem:[#allocation6 + $0x58] sm:$0xf]
    %v204 = vld [vmem:[#allocation6 + $0x5c] sm:$0xf]
    %v205 = vld [vmem:[#allocation6 + $0x60] sm:$0xf]
    %v206 = vld [vmem:[#allocation6 + $0x64] sm:$0xf]
    %v207 = vld [vmem:[#allocation6 + $0x68] sm:$0xf]
    %v208 = vld [vmem:[#allocation6 + $0x6c] sm:$0xf]
    %v209 = vld [vmem:[#allocation6 + $0x70] sm:$0xf]
    %v210 = vld [vmem:[#allocation6 + $0x74] sm:$0xf]
    %v211 = vld [vmem:[#allocation6 + $0x78] sm:$0xf]
    %v212 = vld [vmem:[#allocation6 + $0x7c] sm:$0xf]
    %v213 = vld [vmem:[#allocation7] sm:$0xff]
    %v214 = vld [vmem:[#allocation7 + $0x8] sm:$0xff]
    %v215 = vld [vmem:[#allocation7 + $0x10] sm:$0xff]
    %v216 = vld [vmem:[#allocation7 + $0x18] sm:$0xff]
    %v217 = vld [vmem:[#allocation7 + $0x20] sm:$0xff]
    %v218 = vld [vmem:[#allocation7 + $0x28] sm:$0xff]
    %v219 = vld [vmem:[#allocation7 + $0x30] sm:$0xff]
    %v220 = vld [vmem:[#allocation7 + $0x38] sm:$0xff]
    %v221 = vld [vmem:[#allocation7 + $0x40] sm:$0xff]
    %v222 = vld [vmem:[#allocation7 + $0x48] sm:$0xff]
    %v223 = vld [vmem:[#allocation7 + $0x50] sm:$0xff]
    %v224 = vld [vmem:[#allocation7 + $0x58] sm:$0xff]
    %v225 = vld [vmem:[#allocation7 + $0x60] sm:$0xff]
    %v226 = vld [vmem:[#allocation7 + $0x68] sm:$0xff]
    %v227 = vld [vmem:[#allocation7 + $0x70] sm:$0xff]
    %v228 = vld [vmem:[#allocation7 + $0x78] sm:$0xff]
    %v229 = vld [vmem:[#allocation7 + $0x80] sm:$0xff]
    %v230 = vld [vmem:[#allocation7 + $0x88] sm:$0xff]
    %v231 = vld [vmem:[#allocation7 + $0x90] sm:$0xff]
    %v232 = vld [vmem:[#allocation7 + $0x98] sm:$0xff]
    %v233 = vld [vmem:[#allocation7 + $0xa0] sm:$0xff]
    %v234 = vld [vmem:[#allocation7 + $0xa8] sm:$0xff]
    %v235 = vld [vmem:[#allocation7 + $0xb0] sm:$0xff]
    %v236 = vld [vmem:[#allocation7 + $0xb8] sm:$0xff]
    %v237 = vld [vmem:[#allocation7 + $0xc0] sm:$0xff]
    %v238 = vld [vmem:[#allocation7 + $0xc8] sm:$0xff]
    %v239 = vld [vmem:[#allocation7 + $0xd0] sm:$0xff]
    %v240 = vld [vmem:[#allocation7 + $0xd8] sm:$0xff]
    %v241 = vld [vmem:[#allocation7 + $0xe0] sm:$0xff]
    %v242 = vld [vmem:[#allocation7 + $0xe8] sm:$0xff]
    %v243 = vld [vmem:[#allocation7 + $0xf0] sm:$0xff]
    %v244 = vld [vmem:[#allocation7 + $0xf8] sm:$0xff]
    %v245 = vld [vmem:[%s6] sm:$0xff]
    %v246 = vld [vmem:[%s6 + $0x8] sm:$0xff]
    %v249 = vunpack.c.l.b16 %v83
    %v250 = vunpack.c.h.b16 %v83
    %v251 = vunpack.c.l.b16 %v84
    %v252 = vunpack.c.h.b16 %v84
    %v253 = vpack.c.b16 %v249, %v249
    %v254 = vpack.c.b16 %v250, %v250
    %v255 = vpack.c.b16 %v251, %v251
    %v256 = vpack.c.b16 %v252, %v252
    %v325 = vunpack.c.l.b16 %v117
    %v326 = vunpack.c.h.b16 %v117
    %v327 = vunpack.c.l.b16 %v118
    %v328 = vunpack.c.h.b16 %v118
    %v329 = vunpack.c.l.b16 %v119
    %v330 = vunpack.c.h.b16 %v119
    %v331 = vunpack.c.l.b16 %v120
    %v332 = vunpack.c.h.b16 %v120
    %v333 = vunpack.c.l.b16 %v121
    %v334 = vunpack.c.h.b16 %v121
    %v335 = vunpack.c.l.b16 %v122
    %v336 = vunpack.c.h.b16 %v122
    %v337 = vunpack.c.l.b16 %v123
    %v338 = vunpack.c.h.b16 %v123
    %v339 = vunpack.c.l.b16 %v124
    %v340 = vunpack.c.h.b16 %v124
    %v341 = vunpack.c.l.b16 %v125
    %v342 = vunpack.c.h.b16 %v125
    %v343 = vunpack.c.l.b16 %v126
    %v344 = vunpack.c.h.b16 %v126
    %v345 = vunpack.c.l.b16 %v127
    %v346 = vunpack.c.h.b16 %v127
    %v347 = vunpack.c.l.b16 %v128
    %v348 = vunpack.c.h.b16 %v128
    %v349 = vunpack.c.l.b16 %v129
    %v350 = vunpack.c.h.b16 %v129
    %v351 = vunpack.c.l.b16 %v130
    %v352 = vunpack.c.h.b16 %v130
    %v353 = vunpack.c.l.b16 %v131
    %v354 = vunpack.c.h.b16 %v131
    %v355 = vunpack.c.l.b16 %v132
    %v356 = vunpack.c.h.b16 %v132
    %v357 = vunpack.c.l.b16 %v133
    %v358 = vunpack.c.h.b16 %v133
    %v359 = vunpack.c.l.b16 %v134
    %v360 = vunpack.c.h.b16 %v134
    %v361 = vunpack.c.l.b16 %v135
    %v362 = vunpack.c.h.b16 %v135
    %v363 = vunpack.c.l.b16 %v136
    %v364 = vunpack.c.h.b16 %v136
    %v365 = vunpack.c.l.b16 %v137
    %v366 = vunpack.c.h.b16 %v137
    %v367 = vunpack.c.l.b16 %v138
    %v368 = vunpack.c.h.b16 %v138
    %v369 = vunpack.c.l.b16 %v139
    %v370 = vunpack.c.h.b16 %v139
    %v371 = vunpack.c.l.b16 %v140
    %v372 = vunpack.c.h.b16 %v140
    %v373 = vunpack.c.l.b16 %v141
    %v374 = vunpack.c.h.b16 %v141
    %v375 = vunpack.c.l.b16 %v142
    %v376 = vunpack.c.h.b16 %v142
    %v377 = vunpack.c.l.b16 %v143
    %v378 = vunpack.c.h.b16 %v143
    %v379 = vunpack.c.l.b16 %v144
    %v380 = vunpack.c.h.b16 %v144
    %v381 = vunpack.c.l.b16 %v145
    %v382 = vunpack.c.h.b16 %v145
    %v383 = vunpack.c.l.b16 %v146
    %v384 = vunpack.c.h.b16 %v146
    %v385 = vunpack.c.l.b16 %v147
    %v386 = vunpack.c.h.b16 %v147
    %v387 = vunpack.c.l.b16 %v148
    %v388 = vunpack.c.h.b16 %v148
    %v389 = vunpack.c.l.b16 %v149
    %v390 = vunpack.c.h.b16 %v149
    %v391 = vunpack.c.l.b16 %v150
    %v392 = vunpack.c.h.b16 %v150
    %v393 = vunpack.c.l.b16 %v151
    %v394 = vunpack.c.h.b16 %v151
    %v395 = vunpack.c.l.b16 %v152
    %v396 = vunpack.c.h.b16 %v152
    %v397 = vunpack.c.l.b16 %v153
    %v398 = vunpack.c.h.b16 %v153
    %v399 = vunpack.c.l.b16 %v154
    %v400 = vunpack.c.h.b16 %v154
    %v401 = vunpack.c.l.b16 %v155
    %v402 = vunpack.c.h.b16 %v155
    %v403 = vunpack.c.l.b16 %v156
    %v404 = vunpack.c.h.b16 %v156
    %v405 = vunpack.c.l.b16 %v157
    %v406 = vunpack.c.h.b16 %v157
    %v407 = vunpack.c.l.b16 %v158
    %v408 = vunpack.c.h.b16 %v158
    %v409 = vunpack.c.l.b16 %v159
    %v410 = vunpack.c.h.b16 %v159
    %v411 = vunpack.c.l.b16 %v160
    %v412 = vunpack.c.h.b16 %v160
    %v413 = vunpack.c.l.b16 %v161
    %v414 = vunpack.c.h.b16 %v161
    %v415 = vunpack.c.l.b16 %v162
    %v416 = vunpack.c.h.b16 %v162
    %v417 = vunpack.c.l.b16 %v163
    %v418 = vunpack.c.h.b16 %v163
    %v419 = vunpack.c.l.b16 %v164
    %v420 = vunpack.c.h.b16 %v164
    %v421 = vunpack.c.l.b16 %v165
    %v422 = vunpack.c.h.b16 %v165
    %v423 = vunpack.c.l.b16 %v166
    %v424 = vunpack.c.h.b16 %v166
    %v425 = vunpack.c.l.b16 %v167
    %v426 = vunpack.c.h.b16 %v167
    %v427 = vunpack.c.l.b16 %v168
    %v428 = vunpack.c.h.b16 %v168
    %v429 = vunpack.c.l.b16 %v169
    %v430 = vunpack.c.h.b16 %v169
    %v431 = vunpack.c.l.b16 %v170
    %v432 = vunpack.c.h.b16 %v170
    %v433 = vunpack.c.l.b16 %v171
    %v434 = vunpack.c.h.b16 %v171
    %v435 = vunpack.c.l.b16 %v172
    %v436 = vunpack.c.h.b16 %v172
    %v437 = vunpack.c.l.b16 %v173
    %v438 = vunpack.c.h.b16 %v173
    %v439 = vunpack.c.l.b16 %v174
    %v440 = vunpack.c.h.b16 %v174
    %v441 = vunpack.c.l.b16 %v175
    %v442 = vunpack.c.h.b16 %v175
    %v443 = vunpack.c.l.b16 %v176
    %v444 = vunpack.c.h.b16 %v176
    %v445 = vunpack.c.l.b16 %v177
    %v446 = vunpack.c.h.b16 %v177
    %v447 = vunpack.c.l.b16 %v178
    %v448 = vunpack.c.h.b16 %v178
    %v449 = vunpack.c.l.b16 %v179
    %v450 = vunpack.c.h.b16 %v179
    %v451 = vunpack.c.l.b16 %v180
    %v452 = vunpack.c.h.b16 %v180
    %v453 = vpack.c.b16 %v327, %v325
    %v454 = vpack.c.b16 %v328, %v326
    %v455 = vpack.c.b16 %v331, %v329
    %v456 = vpack.c.b16 %v332, %v330
    %v457 = vpack.c.b16 %v335, %v333
    %v458 = vpack.c.b16 %v336, %v334
    %v459 = vpack.c.b16 %v339, %v337
    %v460 = vpack.c.b16 %v340, %v338
    %v461 = vpack.c.b16 %v343, %v341
    %v462 = vpack.c.b16 %v344, %v342
    %v463 = vpack.c.b16 %v347, %v345
    %v464 = vpack.c.b16 %v348, %v346
    %v465 = vpack.c.b16 %v351, %v349
    %v466 = vpack.c.b16 %v352, %v350
    %v467 = vpack.c.b16 %v355, %v353
    %v468 = vpack.c.b16 %v356, %v354
    %v469 = vpack.c.b16 %v359, %v357
    %v470 = vpack.c.b16 %v360, %v358
    %v471 = vpack.c.b16 %v363, %v361
    %v472 = vpack.c.b16 %v364, %v362
    %v473 = vpack.c.b16 %v367, %v365
    %v474 = vpack.c.b16 %v368, %v366
    %v475 = vpack.c.b16 %v371, %v369
    %v476 = vpack.c.b16 %v372, %v370
    %v477 = vpack.c.b16 %v375, %v373
    %v478 = vpack.c.b16 %v376, %v374
    %v479 = vpack.c.b16 %v379, %v377
    %v480 = vpack.c.b16 %v380, %v378
    %v481 = vpack.c.b16 %v383, %v381
    %v482 = vpack.c.b16 %v384, %v382
    %v483 = vpack.c.b16 %v387, %v385
    %v484 = vpack.c.b16 %v388, %v386
    %v485 = vpack.c.b16 %v391, %v389
    %v486 = vpack.c.b16 %v392, %v390
    %v487 = vpack.c.b16 %v395, %v393
    %v488 = vpack.c.b16 %v396, %v394
    %v489 = vpack.c.b16 %v399, %v397
    %v490 = vpack.c.b16 %v400, %v398
    %v491 = vpack.c.b16 %v403, %v401
    %v492 = vpack.c.b16 %v404, %v402
    %v493 = vpack.c.b16 %v407, %v405
    %v494 = vpack.c.b16 %v408, %v406
    %v495 = vpack.c.b16 %v411, %v409
    %v496 = vpack.c.b16 %v412, %v410
    %v497 = vpack.c.b16 %v415, %v413
    %v498 = vpack.c.b16 %v416, %v414
    %v499 = vpack.c.b16 %v419, %v417
    %v500 = vpack.c.b16 %v420, %v418
    %v501 = vpack.c.b16 %v423, %v421
    %v502 = vpack.c.b16 %v424, %v422
    %v503 = vpack.c.b16 %v427, %v425
    %v504 = vpack.c.b16 %v428, %v426
    %v505 = vpack.c.b16 %v431, %v429
    %v506 = vpack.c.b16 %v432, %v430
    %v507 = vpack.c.b16 %v435, %v433
    %v508 = vpack.c.b16 %v436, %v434
    %v509 = vpack.c.b16 %v439, %v437
    %v510 = vpack.c.b16 %v440, %v438
    %v511 = vpack.c.b16 %v443, %v441
    %v512 = vpack.c.b16 %v444, %v442
    %v513 = vpack.c.b16 %v447, %v445
    %v514 = vpack.c.b16 %v448, %v446
    %v515 = vpack.c.b16 %v451, %v449
    %v516 = vpack.c.b16 %v452, %v450
    %581 = vmatprep.subr.bf16.mxu0 %v454
    %582 = vmatpush1.bf16.msra.mxu0 %v453
    %583 = vmatprep.subr.bf16.mxu0 %v456
    %584 = vmatpush1.bf16.msra.mxu0 %v455
    %585 = vmatprep.subr.bf16.mxu0 %v458
    %586 = vmatpush1.bf16.msra.mxu0 %v457
    %587 = vmatprep.subr.bf16.mxu0 %v460
    %588 = vmatpush1.bf16.msra.mxu0 %v459
    %589 = vmatprep.subr.bf16.mxu0 %v462
    %590 = vmatpush1.bf16.msra.mxu0 %v461
    %591 = vmatprep.subr.bf16.mxu0 %v464
    %592 = vmatpush1.bf16.msra.mxu0 %v463
    %593 = vmatprep.subr.bf16.mxu0 %v466
    %594 = vmatpush1.bf16.msra.mxu0 %v465
    %595 = vmatprep.subr.bf16.mxu0 %v468
    %596 = vmatpush1.bf16.msra.mxu0 %v467
    %597 = vmatprep.subr.bf16.mxu0 %v470
    %598 = vmatpush1.bf16.msra.mxu0 %v469
    %599 = vmatprep.subr.bf16.mxu0 %v472
    %600 = vmatpush1.bf16.msra.mxu0 %v471
    %601 = vmatprep.subr.bf16.mxu0 %v474
    %602 = vmatpush1.bf16.msra.mxu0 %v473
    %603 = vmatprep.subr.bf16.mxu0 %v476
    %604 = vmatpush1.bf16.msra.mxu0 %v475
    %605 = vmatprep.subr.bf16.mxu0 %v478
    %606 = vmatpush1.bf16.msra.mxu0 %v477
    %607 = vmatprep.subr.bf16.mxu0 %v480
    %608 = vmatpush1.bf16.msra.mxu0 %v479
    %609 = vmatprep.subr.bf16.mxu0 %v482
    %610 = vmatpush1.bf16.msra.mxu0 %v481
    %611 = vmatprep.subr.bf16.mxu0 %v484
    %612 = vmatpush1.bf16.msra.mxu0 %v483
    %613 = vmatprep.mubr.bf16.mxu0 %v254
    %614 = vmatmul.mubr.bf16.gmra.mrb[0].mxu0 %v253
    %v615 = vpop.f32.mrb[0].mxu0
    %v616 = vadd.f32 0.0, %v615
    %v617 = vpop.f32.mrb[0].mxu0
    %v618 = vadd.f32 0.0, %v617
    %v619 = vpop.f32.mrb[0].mxu0
    %v620 = vpop.f32.mrb[0].mxu0
    %621 = vdwg.mxu0
    %622 = vmatprep.subr.bf16.mxu0 %v486
    %623 = vmatpush1.bf16.msra.mxu0 %v485
    %624 = vmatprep.subr.bf16.mxu0 %v488
    %625 = vmatpush1.bf16.msra.mxu0 %v487
    %626 = vmatprep.subr.bf16.mxu0 %v490
    %627 = vmatpush1.bf16.msra.mxu0 %v489
    %628 = vmatprep.subr.bf16.mxu0 %v492
    %629 = vmatpush1.bf16.msra.mxu0 %v491
    %630 = vmatprep.subr.bf16.mxu0 %v494
    %631 = vmatpush1.bf16.msra.mxu0 %v493
    %632 = vmatprep.subr.bf16.mxu0 %v496
    %633 = vmatpush1.bf16.msra.mxu0 %v495
    %634 = vmatprep.subr.bf16.mxu0 %v498
    %635 = vmatpush1.bf16.msra.mxu0 %v497
    %636 = vmatprep.subr.bf16.mxu0 %v500
    %637 = vmatpush1.bf16.msra.mxu0 %v499
    %638 = vmatprep.subr.bf16.mxu0 %v502
    %639 = vmatpush1.bf16.msra.mxu0 %v501
    %640 = vmatprep.subr.bf16.mxu0 %v504
    %641 = vmatpush1.bf16.msra.mxu0 %v503
    %642 = vmatprep.subr.bf16.mxu0 %v506
    %643 = vmatpush1.bf16.msra.mxu0 %v505
    %644 = vmatprep.subr.bf16.mxu0 %v508
    %645 = vmatpush1.bf16.msra.mxu0 %v507
    %646 = vmatprep.subr.bf16.mxu0 %v510
    %647 = vmatpush1.bf16.msra.mxu0 %v509
    %648 = vmatprep.subr.bf16.mxu0 %v512
    %649 = vmatpush1.bf16.msra.mxu0 %v511
    %650 = vmatprep.subr.bf16.mxu0 %v514
    %651 = vmatpush1.bf16.msra.mxu0 %v513
    %652 = vmatprep.subr.bf16.mxu0 %v516
    %653 = vmatpush1.bf16.msra.mxu0 %v515
    %654 = vmatprep.mubr.bf16.mxu0 %v256
    %655 = vmatmul.mubr.bf16.gmra.mrb[0].mxu0 %v255
    %v656 = vpop.f32.mrb[0].mxu0
    %v657 = vadd.f32 %v616, %v656
    %v658 = vpop.f32.mrb[0].mxu0
    %v659 = vadd.f32 %v618, %v658
    %v660 = vpop.f32.mrb[0].mxu0
    %v661 = vpop.f32.mrb[0].mxu0
    %662 = vdwg.mxu0
    %v663 = vlaneseq
    %v664 = vand.u32 %v663, 127
    %vm665 = vcmp.lt.s32.totalorder %v664, 64
    %v667 = vrot.slane %v246, 6
    %v668 = vlaneseq
    %v669 = vshrl.u32 %v668, 7
    %v670 = vsub.s32 0, %v669
    %v671 = vrot.slane %v667, %v670
    %v673 = vmul.f32 %v82, %v671
    %v674 = vrot.slane %v246, 7
    %v675 = vlaneseq
    %v676 = vshrl.u32 %v675, 7
    %v677 = vsub.s32 0, %v676
    %v678 = vrot.slane %v674, %v677
    %v680 = vadd.f32 %v673, %v678
    %v681 = vpack.c.bf16 %v680, %v680
    %v698 = vunpack.c.l.b16 %v101
    %v699 = vunpack.c.l.b16 %v102
    %v700 = vunpack.c.l.b16 %v103
    %v701 = vunpack.c.l.b16 %v104
    %v702 = vunpack.c.l.b16 %v105
    %v703 = vunpack.c.l.b16 %v106
    %v704 = vunpack.c.l.b16 %v107
    %v705 = vunpack.c.l.b16 %v108
    %v706 = vunpack.c.l.b16 %v109
    %v707 = vunpack.c.l.b16 %v110
    %v708 = vunpack.c.l.b16 %v111
    %v709 = vunpack.c.l.b16 %v112
    %v710 = vunpack.c.l.b16 %v113
    %v711 = vunpack.c.l.b16 %v114
    %v712 = vunpack.c.l.b16 %v115
    %v713 = vunpack.c.l.b16 %v116
    %v714 = vpack.c.b16 %v699, %v698
    %v715 = vpack.c.b16 %v701, %v700
    %v716 = vpack.c.b16 %v703, %v702
    %v717 = vpack.c.b16 %v705, %v704
    %v718 = vpack.c.b16 %v707, %v706
    %v719 = vpack.c.b16 %v709, %v708
    %v720 = vpack.c.b16 %v711, %v710
    %v721 = vpack.c.b16 %v713, %v712
    %730 = vmatprep.subr.bf16.mxu0 0
    %731 = vmatpush1.bf16.msra.mxu0 %v714
    %732 = vmatprep.subr.bf16.mxu0 0
    %733 = vmatpush1.bf16.msra.mxu0 %v715
    %734 = vmatprep.subr.bf16.mxu0 0
    %735 = vmatpush1.bf16.msra.mxu0 %v716
    %736 = vmatprep.subr.bf16.mxu0 0
    %737 = vmatpush1.bf16.msra.mxu0 %v717
    %738 = vmatprep.subr.bf16.mxu0 0
    %739 = vmatpush1.bf16.msra.mxu0 %v718
    %740 = vmatprep.subr.bf16.mxu0 0
    %741 = vmatpush1.bf16.msra.mxu0 %v719
    %742 = vmatprep.subr.bf16.mxu0 0
    %743 = vmatpush1.bf16.msra.mxu0 %v720
    %744 = vmatprep.subr.bf16.mxu0 0
    %745 = vmatpush1.bf16.msra.mxu0 %v721
    %746 = vmatprep.subr.bf16.mxu0 0
    %747 = vmatpush1.bf16.msra.mxu0 0
    %748 = vmatprep.subr.bf16.mxu0 0
    %749 = vmatpush1.bf16.msra.mxu0 0
    %750 = vmatprep.subr.bf16.mxu0 0
    %751 = vmatpush1.bf16.msra.mxu0 0
    %752 = vmatprep.subr.bf16.mxu0 0
    %753 = vmatpush1.bf16.msra.mxu0 0
    %754 = vmatprep.subr.bf16.mxu0 0
    %755 = vmatpush1.bf16.msra.mxu0 0
    %756 = vmatprep.subr.bf16.mxu0 0
    %757 = vmatpush1.bf16.msra.mxu0 0
    %758 = vmatprep.subr.bf16.mxu0 0
    %759 = vmatpush1.bf16.msra.mxu0 0
    %760 = vmatprep.subr.bf16.mxu0 0
    %761 = vmatpush1.bf16.msra.mxu0 0
    %762 = vmatprep.mubr.bf16.mxu0 0
    %763 = vmatmul.mubr.bf16.gmra.mrb[0].mxu0 %v681
    %v764 = vpop.f32.mrb[0].mxu0
    %v765 = vadd.f32 %v659, %v764
    %v766 = vpop.f32.mrb[0].mxu0
    %v767 = vpop.f32.mrb[0].mxu0
    %v768 = vpop.f32.mrb[0].mxu0
    %769 = vdwg.mxu0
    %v770 = vlaneseq
    %v771 = vshrl.u32 %v770, 7
    %v772 = vsub.s32 0, %v771
    %v773 = vrot.slane %v246, %v772
    %v775 = vadd.f32 %v765, %v773
    %v776 = vtanh.pop %v775
    %v777 = vmax.f32 %v775, 0.0
    %v778 = vsel %vm665, 1, 0
    %vm779 = vcmp.eq.s32.totalorder %v778, 1
    %v780 = vsel %vm779, %v776, %v777
    %v781 = vpack.c.bf16 %v780, %v780
    %v782 = vrot.slane %v246, 1
    %v783 = vlaneseq
    %v784 = vshrl.u32 %v783, 7
    %v785 = vsub.s32 0, %v784
    %v786 = vrot.slane %v782, %v785
    %v804 = vunpack.c.l.b16 %v197
    %v805 = vunpack.c.l.b16 %v198
    %v806 = vunpack.c.l.b16 %v199
    %v807 = vunpack.c.l.b16 %v200
    %v808 = vunpack.c.l.b16 %v201
    %v809 = vunpack.c.l.b16 %v202
    %v810 = vunpack.c.l.b16 %v203
    %v811 = vunpack.c.l.b16 %v204
    %v812 = vunpack.c.l.b16 %v205
    %v813 = vunpack.c.l.b16 %v206
    %v814 = vunpack.c.l.b16 %v207
    %v815 = vunpack.c.l.b16 %v208
    %v816 = vunpack.c.l.b16 %v209
    %v817 = vunpack.c.l.b16 %v210
    %v818 = vunpack.c.l.b16 %v211
    %v819 = vunpack.c.l.b16 %v212
    %v820 = vpack.c.b16 %v805, %v804
    %v821 = vpack.c.b16 %v807, %v806
    %v822 = vpack.c.b16 %v809, %v808
    %v823 = vpack.c.b16 %v811, %v810
    %v824 = vpack.c.b16 %v813, %v812
    %v825 = vpack.c.b16 %v815, %v814
    %v826 = vpack.c.b16 %v817, %v816
    %v827 = vpack.c.b16 %v819, %v818
    %836 = vmatprep.subr.bf16.mxu0 0
    %837 = vmatpush1.bf16.msra.mxu0 %v820
    %838 = vmatprep.subr.bf16.mxu0 0
    %839 = vmatpush1.bf16.msra.mxu0 %v821
    %840 = vmatprep.subr.bf16.mxu0 0
    %841 = vmatpush1.bf16.msra.mxu0 %v822
    %842 = vmatprep.subr.bf16.mxu0 0
    %843 = vmatpush1.bf16.msra.mxu0 %v823
    %844 = vmatprep.subr.bf16.mxu0 0
    %845 = vmatpush1.bf16.msra.mxu0 %v824
    %846 = vmatprep.subr.bf16.mxu0 0
    %847 = vmatpush1.bf16.msra.mxu0 %v825
    %848 = vmatprep.subr.bf16.mxu0 0
    %849 = vmatpush1.bf16.msra.mxu0 %v826
    %850 = vmatprep.subr.bf16.mxu0 0
    %851 = vmatpush1.bf16.msra.mxu0 %v827
    %852 = vmatprep.subr.bf16.mxu0 0
    %853 = vmatpush1.bf16.msra.mxu0 0
    %854 = vmatprep.subr.bf16.mxu0 0
    %855 = vmatpush1.bf16.msra.mxu0 0
    %856 = vmatprep.subr.bf16.mxu0 0
    %857 = vmatpush1.bf16.msra.mxu0 0
    %858 = vmatprep.subr.bf16.mxu0 0
    %859 = vmatpush1.bf16.msra.mxu0 0
    %860 = vmatprep.subr.bf16.mxu0 0
    %861 = vmatpush1.bf16.msra.mxu0 0
    %862 = vmatprep.subr.bf16.mxu0 0
    %863 = vmatpush1.bf16.msra.mxu0 0
    %864 = vmatprep.subr.bf16.mxu0 0
    %865 = vmatpush1.bf16.msra.mxu0 0
    %866 = vmatprep.subr.bf16.mxu0 0
    %867 = vmatpush1.bf16.msra.mxu0 0
    %868 = vmatprep.mubr.bf16.mxu0 0
    %869 = vmatmul.mubr.bf16.gmra.mrb[0].mxu0 %v781
    %v870 = vpop.f32.mrb[0].mxu0
    %v871 = vadd.f32 %v786, %v870
    %v872 = vpop.f32.mrb[0].mxu0
    %v873 = vpop.f32.mrb[0].mxu0
    %v874 = vpop.f32.mrb[0].mxu0
    %875 = vdwg.mxu0
    %v876 = vtanh.pop %v871
    %v877 = vmax.f32 %v871, 0.0
    %v878 = vsel %vm779, %v876, %v877
    %v879 = vpack.c.bf16 %v878, %v878
    %v880 = vrot.slane %v246, 2
    %v881 = vlaneseq
    %v882 = vshrl.u32 %v881, 7
    %v883 = vsub.s32 0, %v882
    %v884 = vrot.slane %v880, %v883
    %v885 = vlaneseq
    %v886 = vshrl.u32 %v885, 7
    %v887 = vsub.s32 1, %v886
    %v888 = vrot.slane %v880, %v887
    %v907 = vunpack.c.l.b16 %v229
    %v908 = vunpack.c.h.b16 %v229
    %v909 = vunpack.c.l.b16 %v230
    %v910 = vunpack.c.h.b16 %v230
    %v911 = vunpack.c.l.b16 %v231
    %v912 = vunpack.c.h.b16 %v231
    %v913 = vunpack.c.l.b16 %v232
    %v914 = vunpack.c.h.b16 %v232
    %v915 = vunpack.c.l.b16 %v233
    %v916 = vunpack.c.h.b16 %v233
    %v917 = vunpack.c.l.b16 %v234
    %v918 = vunpack.c.h.b16 %v234
    %v919 = vunpack.c.l.b16 %v235
    %v920 = vunpack.c.h.b16 %v235
    %v921 = vunpack.c.l.b16 %v236
    %v922 = vunpack.c.h.b16 %v236
    %v923 = vunpack.c.l.b16 %v237
    %v924 = vunpack.c.h.b16 %v237
    %v925 = vunpack.c.l.b16 %v238
    %v926 = vunpack.c.h.b16 %v238
    %v927 = vunpack.c.l.b16 %v239
    %v928 = vunpack.c.h.b16 %v239
    %v929 = vunpack.c.l.b16 %v240
    %v930 = vunpack.c.h.b16 %v240
    %v931 = vunpack.c.l.b16 %v241
    %v932 = vunpack.c.h.b16 %v241
    %v933 = vunpack.c.l.b16 %v242
    %v934 = vunpack.c.h.b16 %v242
    %v935 = vunpack.c.l.b16 %v243
    %v936 = vunpack.c.h.b16 %v243
    %v937 = vunpack.c.l.b16 %v244
    %v938 = vunpack.c.h.b16 %v244
    %v939 = vpack.c.b16 %v909, %v907
    %v940 = vpack.c.b16 %v910, %v908
    %v941 = vpack.c.b16 %v913, %v911
    %v942 = vpack.c.b16 %v914, %v912
    %v943 = vpack.c.b16 %v917, %v915
    %v944 = vpack.c.b16 %v918, %v916
    %v945 = vpack.c.b16 %v921, %v919
    %v946 = vpack.c.b16 %v922, %v920
    %v947 = vpack.c.b16 %v925, %v923
    %v948 = vpack.c.b16 %v926, %v924
    %v949 = vpack.c.b16 %v929, %v927
    %v950 = vpack.c.b16 %v930, %v928
    %v951 = vpack.c.b16 %v933, %v931
    %v952 = vpack.c.b16 %v934, %v932
    %v953 = vpack.c.b16 %v937, %v935
    %v954 = vpack.c.b16 %v938, %v936
    %971 = vmatprep.subr.bf16.mxu0 %v940
    %972 = vmatpush1.bf16.msra.mxu0 %v939
    %973 = vmatprep.subr.bf16.mxu0 %v942
    %974 = vmatpush1.bf16.msra.mxu0 %v941
    %975 = vmatprep.subr.bf16.mxu0 %v944
    %976 = vmatpush1.bf16.msra.mxu0 %v943
    %977 = vmatprep.subr.bf16.mxu0 %v946
    %978 = vmatpush1.bf16.msra.mxu0 %v945
    %979 = vmatprep.subr.bf16.mxu0 %v948
    %980 = vmatpush1.bf16.msra.mxu0 %v947
    %981 = vmatprep.subr.bf16.mxu0 %v950
    %982 = vmatpush1.bf16.msra.mxu0 %v949
    %983 = vmatprep.subr.bf16.mxu0 %v952
    %984 = vmatpush1.bf16.msra.mxu0 %v951
    %985 = vmatprep.subr.bf16.mxu0 %v954
    %986 = vmatpush1.bf16.msra.mxu0 %v953
    %987 = vmatprep.subr.bf16.mxu0 0
    %988 = vmatpush1.bf16.msra.mxu0 0
    %989 = vmatprep.subr.bf16.mxu0 0
    %990 = vmatpush1.bf16.msra.mxu0 0
    %991 = vmatprep.subr.bf16.mxu0 0
    %992 = vmatpush1.bf16.msra.mxu0 0
    %993 = vmatprep.subr.bf16.mxu0 0
    %994 = vmatpush1.bf16.msra.mxu0 0
    %995 = vmatprep.subr.bf16.mxu0 0
    %996 = vmatpush1.bf16.msra.mxu0 0
    %997 = vmatprep.subr.bf16.mxu0 0
    %998 = vmatpush1.bf16.msra.mxu0 0
    %999 = vmatprep.subr.bf16.mxu0 0
    %1000 = vmatpush1.bf16.msra.mxu0 0
    %1001 = vmatprep.subr.bf16.mxu0 0
    %1002 = vmatpush1.bf16.msra.mxu0 0
    %1003 = vmatprep.mubr.bf16.mxu0 0
    %1004 = vmatmul.mubr.bf16.gmra.mrb[0].mxu0 %v879
    %v1005 = vpop.f32.mrb[0].mxu0
    %v1006 = vadd.f32 %v884, %v1005
    %v1007 = vpop.f32.mrb[0].mxu0
    %v1008 = vadd.f32 %v888, %v1007
    %v1009 = vpop.f32.mrb[0].mxu0
    %v1010 = vpop.f32.mrb[0].mxu0
    %1011 = vdwg.mxu0
    %v1012 = vsub.f32 %v680, %v1008
    %v1013 = vsub.f32 0.0, %v1006
    %v1014 = vmul.f32 %v1013, 1.442695
    %v1015 = vpow.pop %v1014
    %v1016 = vmul.f32 %v1012, %v1015
    %v1018 = vrot.slane %v245, 6
    %v1019 = vlaneseq
    %v1020 = vshrl.u32 %v1019, 7
    %v1021 = vsub.s32 0, %v1020
    %v1022 = vrot.slane %v1018, %v1021
    %v1024 = vmul.f32 %v1016, %v1022
    %v1025 = vrot.slane %v245, 7
    %v1026 = vlaneseq
    %v1027 = vshrl.u32 %v1026, 7
    %v1028 = vsub.s32 0, %v1027
    %v1029 = vrot.slane %v1025, %v1028
    %v1031 = vadd.f32 %v1024, %v1029
    %v1032 = vpack.c.bf16 %v1031, %v1031
    %v1049 = vunpack.c.l.b16 %v85
    %v1050 = vunpack.c.l.b16 %v86
    %v1051 = vunpack.c.l.b16 %v87
    %v1052 = vunpack.c.l.b16 %v88
    %v1053 = vunpack.c.l.b16 %v89
    %v1054 = vunpack.c.l.b16 %v90
    %v1055 = vunpack.c.l.b16 %v91
    %v1056 = vunpack.c.l.b16 %v92
    %v1057 = vunpack.c.l.b16 %v93
    %v1058 = vunpack.c.l.b16 %v94
    %v1059 = vunpack.c.l.b16 %v95
    %v1060 = vunpack.c.l.b16 %v96
    %v1061 = vunpack.c.l.b16 %v97
    %v1062 = vunpack.c.l.b16 %v98
    %v1063 = vunpack.c.l.b16 %v99
    %v1064 = vunpack.c.l.b16 %v100
    %v1065 = vpack.c.b16 %v1050, %v1049
    %v1066 = vpack.c.b16 %v1052, %v1051
    %v1067 = vpack.c.b16 %v1054, %v1053
    %v1068 = vpack.c.b16 %v1056, %v1055
    %v1069 = vpack.c.b16 %v1058, %v1057
    %v1070 = vpack.c.b16 %v1060, %v1059
    %v1071 = vpack.c.b16 %v1062, %v1061
    %v1072 = vpack.c.b16 %v1064, %v1063
    %1081 = vmatprep.subr.bf16.mxu0 0
    %1082 = vmatpush1.bf16.msra.mxu0 %v1065
    %1083 = vmatprep.subr.bf16.mxu0 0
    %1084 = vmatpush1.bf16.msra.mxu0 %v1066
    %1085 = vmatprep.subr.bf16.mxu0 0
    %1086 = vmatpush1.bf16.msra.mxu0 %v1067
    %1087 = vmatprep.subr.bf16.mxu0 0
    %1088 = vmatpush1.bf16.msra.mxu0 %v1068
    %1089 = vmatprep.subr.bf16.mxu0 0
    %1090 = vmatpush1.bf16.msra.mxu0 %v1069
    %1091 = vmatprep.subr.bf16.mxu0 0
    %1092 = vmatpush1.bf16.msra.mxu0 %v1070
    %1093 = vmatprep.subr.bf16.mxu0 0
    %1094 = vmatpush1.bf16.msra.mxu0 %v1071
    %1095 = vmatprep.subr.bf16.mxu0 0
    %1096 = vmatpush1.bf16.msra.mxu0 %v1072
    %1097 = vmatprep.subr.bf16.mxu0 0
    %1098 = vmatpush1.bf16.msra.mxu0 0
    %1099 = vmatprep.subr.bf16.mxu0 0
    %1100 = vmatpush1.bf16.msra.mxu0 0
    %1101 = vmatprep.subr.bf16.mxu0 0
    %1102 = vmatpush1.bf16.msra.mxu0 0
    %1103 = vmatprep.subr.bf16.mxu0 0
    %1104 = vmatpush1.bf16.msra.mxu0 0
    %1105 = vmatprep.subr.bf16.mxu0 0
    %1106 = vmatpush1.bf16.msra.mxu0 0
    %1107 = vmatprep.subr.bf16.mxu0 0
    %1108 = vmatpush1.bf16.msra.mxu0 0
    %1109 = vmatprep.subr.bf16.mxu0 0
    %1110 = vmatpush1.bf16.msra.mxu0 0
    %1111 = vmatprep.subr.bf16.mxu0 0
    %1112 = vmatpush1.bf16.msra.mxu0 0
    %1113 = vmatprep.mubr.bf16.mxu0 0
    %1114 = vmatmul.mubr.bf16.gmra.mrb[0].mxu0 %v1032
    %v1115 = vpop.f32.mrb[0].mxu0
    %v1116 = vadd.f32 %v657, %v1115
    %v1117 = vpop.f32.mrb[0].mxu0
    %v1118 = vpop.f32.mrb[0].mxu0
    %v1119 = vpop.f32.mrb[0].mxu0
    %1120 = vdwg.mxu0
    %v1121 = vlaneseq
    %v1122 = vshrl.u32 %v1121, 7
    %v1123 = vsub.s32 0, %v1122
    %v1124 = vrot.slane %v245, %v1123
    %v1126 = vadd.f32 %v1116, %v1124
    %v1127 = vtanh.pop %v1126
    %v1128 = vmax.f32 %v1126, 0.0
    %v1129 = vsel %vm779, %v1127, %v1128
    %v1130 = vpack.c.bf16 %v1129, %v1129
    %v1131 = vrot.slane %v245, 1
    %v1132 = vlaneseq
    %v1133 = vshrl.u32 %v1132, 7
    %v1134 = vsub.s32 0, %v1133
    %v1135 = vrot.slane %v1131, %v1134
    %v1153 = vunpack.c.l.b16 %v181
    %v1154 = vunpack.c.l.b16 %v182
    %v1155 = vunpack.c.l.b16 %v183
    %v1156 = vunpack.c.l.b16 %v184
    %v1157 = vunpack.c.l.b16 %v185
    %v1158 = vunpack.c.l.b16 %v186
    %v1159 = vunpack.c.l.b16 %v187
    %v1160 = vunpack.c.l.b16 %v188
    %v1161 = vunpack.c.l.b16 %v189
    %v1162 = vunpack.c.l.b16 %v190
    %v1163 = vunpack.c.l.b16 %v191
    %v1164 = vunpack.c.l.b16 %v192
    %v1165 = vunpack.c.l.b16 %v193
    %v1166 = vunpack.c.l.b16 %v194
    %v1167 = vunpack.c.l.b16 %v195
    %v1168 = vunpack.c.l.b16 %v196
    %v1169 = vpack.c.b16 %v1154, %v1153
    %v1170 = vpack.c.b16 %v1156, %v1155
    %v1171 = vpack.c.b16 %v1158, %v1157
    %v1172 = vpack.c.b16 %v1160, %v1159
    %v1173 = vpack.c.b16 %v1162, %v1161
    %v1174 = vpack.c.b16 %v1164, %v1163
    %v1175 = vpack.c.b16 %v1166, %v1165
    %v1176 = vpack.c.b16 %v1168, %v1167
    %1185 = vmatprep.subr.bf16.mxu0 0
    %1186 = vmatpush1.bf16.msra.mxu0 %v1169
    %1187 = vmatprep.subr.bf16.mxu0 0
    %1188 = vmatpush1.bf16.msra.mxu0 %v1170
    %1189 = vmatprep.subr.bf16.mxu0 0
    %1190 = vmatpush1.bf16.msra.mxu0 %v1171
    %1191 = vmatprep.subr.bf16.mxu0 0
    %1192 = vmatpush1.bf16.msra.mxu0 %v1172
    %1193 = vmatprep.subr.bf16.mxu0 0
    %1194 = vmatpush1.bf16.msra.mxu0 %v1173
    %1195 = vmatprep.subr.bf16.mxu0 0
    %1196 = vmatpush1.bf16.msra.mxu0 %v1174
    %1197 = vmatprep.subr.bf16.mxu0 0
    %1198 = vmatpush1.bf16.msra.mxu0 %v1175
    %1199 = vmatprep.subr.bf16.mxu0 0
    %1200 = vmatpush1.bf16.msra.mxu0 %v1176
    %1201 = vmatprep.subr.bf16.mxu0 0
    %1202 = vmatpush1.bf16.msra.mxu0 0
    %1203 = vmatprep.subr.bf16.mxu0 0
    %1204 = vmatpush1.bf16.msra.mxu0 0
    %1205 = vmatprep.subr.bf16.mxu0 0
    %1206 = vmatpush1.bf16.msra.mxu0 0
    %1207 = vmatprep.subr.bf16.mxu0 0
    %1208 = vmatpush1.bf16.msra.mxu0 0
    %1209 = vmatprep.subr.bf16.mxu0 0
    %1210 = vmatpush1.bf16.msra.mxu0 0
    %1211 = vmatprep.subr.bf16.mxu0 0
    %1212 = vmatpush1.bf16.msra.mxu0 0
    %1213 = vmatprep.subr.bf16.mxu0 0
    %1214 = vmatpush1.bf16.msra.mxu0 0
    %1215 = vmatprep.subr.bf16.mxu0 0
    %1216 = vmatpush1.bf16.msra.mxu0 0
    %1217 = vmatprep.mubr.bf16.mxu0 0
    %1218 = vmatmul.mubr.bf16.gmra.mrb[0].mxu0 %v1130
    %v1219 = vpop.f32.mrb[0].mxu0
    %v1220 = vadd.f32 %v1135, %v1219
    %v1221 = vpop.f32.mrb[0].mxu0
    %v1222 = vpop.f32.mrb[0].mxu0
    %v1223 = vpop.f32.mrb[0].mxu0
    %1224 = vdwg.mxu0
    %v1225 = vtanh.pop %v1220
    %v1226 = vmax.f32 %v1220, 0.0
    %v1227 = vsel %vm779, %v1225, %v1226
    %v1228 = vpack.c.bf16 %v1227, %v1227
    %v1229 = vrot.slane %v245, 2
    %v1230 = vlaneseq
    %v1231 = vshrl.u32 %v1230, 7
    %v1232 = vsub.s32 0, %v1231
    %v1233 = vrot.slane %v1229, %v1232
    %v1234 = vlaneseq
    %v1235 = vshrl.u32 %v1234, 7
    %v1236 = vsub.s32 1, %v1235
    %v1237 = vrot.slane %v1229, %v1236
    %v1256 = vunpack.c.l.b16 %v213
    %v1257 = vunpack.c.h.b16 %v213
    %v1258 = vunpack.c.l.b16 %v214
    %v1259 = vunpack.c.h.b16 %v214
    %v1260 = vunpack.c.l.b16 %v215
    %v1261 = vunpack.c.h.b16 %v215
    %v1262 = vunpack.c.l.b16 %v216
    %v1263 = vunpack.c.h.b16 %v216
    %v1264 = vunpack.c.l.b16 %v217
    %v1265 = vunpack.c.h.b16 %v217
    %v1266 = vunpack.c.l.b16 %v218
    %v1267 = vunpack.c.h.b16 %v218
    %v1268 = vunpack.c.l.b16 %v219
    %v1269 = vunpack.c.h.b16 %v219
    %v1270 = vunpack.c.l.b16 %v220
    %v1271 = vunpack.c.h.b16 %v220
    %v1272 = vunpack.c.l.b16 %v221
    %v1273 = vunpack.c.h.b16 %v221
    %v1274 = vunpack.c.l.b16 %v222
    %v1275 = vunpack.c.h.b16 %v222
    %v1276 = vunpack.c.l.b16 %v223
    %v1277 = vunpack.c.h.b16 %v223
    %v1278 = vunpack.c.l.b16 %v224
    %v1279 = vunpack.c.h.b16 %v224
    %v1280 = vunpack.c.l.b16 %v225
    %v1281 = vunpack.c.h.b16 %v225
    %v1282 = vunpack.c.l.b16 %v226
    %v1283 = vunpack.c.h.b16 %v226
    %v1284 = vunpack.c.l.b16 %v227
    %v1285 = vunpack.c.h.b16 %v227
    %v1286 = vunpack.c.l.b16 %v228
    %v1287 = vunpack.c.h.b16 %v228
    %v1288 = vpack.c.b16 %v1258, %v1256
    %v1289 = vpack.c.b16 %v1259, %v1257
    %v1290 = vpack.c.b16 %v1262, %v1260
    %v1291 = vpack.c.b16 %v1263, %v1261
    %v1292 = vpack.c.b16 %v1266, %v1264
    %v1293 = vpack.c.b16 %v1267, %v1265
    %v1294 = vpack.c.b16 %v1270, %v1268
    %v1295 = vpack.c.b16 %v1271, %v1269
    %v1296 = vpack.c.b16 %v1274, %v1272
    %v1297 = vpack.c.b16 %v1275, %v1273
    %v1298 = vpack.c.b16 %v1278, %v1276
    %v1299 = vpack.c.b16 %v1279, %v1277
    %v1300 = vpack.c.b16 %v1282, %v1280
    %v1301 = vpack.c.b16 %v1283, %v1281
    %v1302 = vpack.c.b16 %v1286, %v1284
    %v1303 = vpack.c.b16 %v1287, %v1285
    %1320 = vmatprep.subr.bf16.mxu0 %v1289
    %1321 = vmatpush1.bf16.msra.mxu0 %v1288
    %1322 = vmatprep.subr.bf16.mxu0 %v1291
    %1323 = vmatpush1.bf16.msra.mxu0 %v1290
    %1324 = vmatprep.subr.bf16.mxu0 %v1293
    %1325 = vmatpush1.bf16.msra.mxu0 %v1292
    %1326 = vmatprep.subr.bf16.mxu0 %v1295
    %1327 = vmatpush1.bf16.msra.mxu0 %v1294
    %1328 = vmatprep.subr.bf16.mxu0 %v1297
    %1329 = vmatpush1.bf16.msra.mxu0 %v1296
    %1330 = vmatprep.subr.bf16.mxu0 %v1299
    %1331 = vmatpush1.bf16.msra.mxu0 %v1298
    %1332 = vmatprep.subr.bf16.mxu0 %v1301
    %1333 = vmatpush1.bf16.msra.mxu0 %v1300
    %1334 = vmatprep.subr.bf16.mxu0 %v1303
    %1335 = vmatpush1.bf16.msra.mxu0 %v1302
    %1336 = vmatprep.subr.bf16.mxu0 0
    %1337 = vmatpush1.bf16.msra.mxu0 0
    %1338 = vmatprep.subr.bf16.mxu0 0
    %1339 = vmatpush1.bf16.msra.mxu0 0
    %1340 = vmatprep.subr.bf16.mxu0 0
    %1341 = vmatpush1.bf16.msra.mxu0 0
    %1342 = vmatprep.subr.bf16.mxu0 0
    %1343 = vmatpush1.bf16.msra.mxu0 0
    %1344 = vmatprep.subr.bf16.mxu0 0
    %1345 = vmatpush1.bf16.msra.mxu0 0
    %1346 = vmatprep.subr.bf16.mxu0 0
    %1347 = vmatpush1.bf16.msra.mxu0 0
    %1348 = vmatprep.subr.bf16.mxu0 0
    %1349 = vmatpush1.bf16.msra.mxu0 0
    %1350 = vmatprep.subr.bf16.mxu0 0
    %1351 = vmatpush1.bf16.msra.mxu0 0
    %1352 = vmatprep.mubr.bf16.mxu0 0
    %1353 = vmatmul.mubr.bf16.gmra.mrb[0].mxu0 %v1228
    %v1354 = vpop.f32.mrb[0].mxu0
    %v1355 = vadd.f32 %v1233, %v1354
    %v1356 = vpop.f32.mrb[0].mxu0
    %v1357 = vadd.f32 %v1237, %v1356
    %v1358 = vpop.f32.mrb[0].mxu0
    %v1359 = vpop.f32.mrb[0].mxu0
    %1360 = vdwg.mxu0
    %v1361 = vsub.f32 %v1031, %v1357
    %v1362 = vsub.f32 0.0, %v1355
    %v1363 = vmul.f32 %v1362, 1.442695
    %v1364 = vpow.pop %v1363
    %v1365 = vmul.f32 %v1361, %v1364
    %1366 = vst [vmem:[%s7] sm:$0xff] %v1365
    // Predicated region
    $region46: #{flow_sample.1} parent=1 // pred_check
      _
    $region47: #{flow_sample.1} parent=1 // pred_check_branch
      %1368 = sbr.rel (0) target = $region49
    $region48: #{flow_sample.1} parent=1 // pred_region
      _
    $region49: #{flow_sample.1} parent=1 // pred_fallthru
      _
    // Predicated region
    $region50: #{flow_sample.1} parent=1 // pred_check
      _
    $region51: #{flow_sample.1} parent=1 // pred_check_branch
      %1370 = sbr.rel (0) target = $region53
    $region52: #{flow_sample.1} parent=1 // pred_region
      _
    $region53: #{flow_sample.1} parent=1 // pred_fallthru
      _
    %1371 = vsyncpa [#allocation3], 1
    %1372 = vsyncpa [#allocation5], 1
    %1373 = vsyncpa [#allocation8], 1

</llo_original>
